<compile_context>
chip_gen: v7x
topology: tpu7x:2x2x1
jax: 0.10.0
libtpu: 0.0.40
codegen_flags: <defaults>
</compile_context>

<pallas_src>
import functools

import jax
import jax.numpy as jnp
from jax.experimental import pallas as pl
from jax.experimental.pallas import tpu as pltpu

EPS = 1e-5  # nn.GroupNorm default


def _round_up(n, m):
    return (n + m - 1) // m * m


def _choose_images_per_step(B, HW):
    """Images packed into one grid step (matmul N = Bt * HW).

    Target ~2048 lanes of matmul N per step to amortize per-step overhead and MXU
    fill/drain, but keep >= 2 grid steps when B >= 2 so both TensorCores get work on
    2-TC chips (v7x).  Bt must divide B (no ragged groups)."""
    target = max(1, 2048 // max(HW, 1))
    if B >= 2:
        target = min(target, max(B // 2, 1))
    bt = 1
    for d in range(1, B + 1):
        if B % d == 0 and d <= target:
            bt = d
    return bt


def _gn_relu(y, gamma, beta):
    """GroupNorm with num_groups == num_channels: per-(sample, channel) stats over H*W,
    affine, ReLU.  y: [C, HW] f32; gamma/beta: [C, 1] f32."""
    mean = jnp.mean(y, axis=1, keepdims=True)
    yc = y - mean
    var = jnp.mean(yc * yc, axis=1, keepdims=True)
    yn = yc * jax.lax.rsqrt(var + EPS)
    return jnp.maximum(yn * gamma + beta, 0.0)


def double_conv_kernel(x_ref, w1_ref, g1_ref, b1_ref, w2_ref, g2_ref, b2_ref,
                       out_ref, ext_ref, taps_ref,
                       *, H, W, Bt, Cin, Cin_p, Cout, Cout_p, LPAD):
    HW = H * W
    rows = ext_ref.shape[0]
    ext_w = ext_ref.shape[1]

    # ---- per-step scratch hygiene (lane-aligned, tiny; megacore-safe) ----
    # Left/right zero borders of the flat strip; padded input-channel rows (they feed
    # conv1's taps and may hold stale y data from the previous step's conv2).
    ext_ref[:, 0:LPAD] = jnp.zeros((rows, LPAD), jnp.bfloat16)
    ext_ref[:, LPAD + HW:ext_w] = jnp.zeros((rows, ext_w - LPAD - HW), jnp.bfloat16)
    if Cin_p > Cin:
        ext_ref[Cin:Cin_p, :] = jnp.zeros((Cin_p - Cin, ext_w), jnp.bfloat16)

    # Horizontal wrap masks for the dw = +-1 taps (computed once per step, reused
    # across both convs and all images; JAX does not CSE broadcast_in_dim).
    wi = jax.lax.broadcasted_iota(jnp.int32, (1, HW), 1) % W
    mask_l = wi >= 1          # valid lanes for dw = -1
    mask_r = wi <= W - 2      # valid lanes for dw = +1

    def write_taps(img_bf16, b, c_p):
        """im2col for one image: write its 9 zero-padded 3x3 neighborhood taps into
        taps_ref[:, b*HW:(b+1)*HW] (tap-major, channel-minor along sublanes), built
        from statically shifted lane slices of the zero-bordered flat strip."""
        # full-width, 128-lane-aligned interior store (f32 -> bf16 cast done here)
        ext_ref[0:img_bf16.shape[0], LPAD:LPAD + HW] = img_bf16
        col = b * HW
        k = 0
        for dh in (-1, 0, 1):          # ki = dh + 1
            for dw in (-1, 0, 1):      # kj = dw + 1
                start = LPAD + dh * W + dw
                t = ext_ref[0:c_p, start:start + HW]        # static lane slice
                if dw == -1:
                    t = jnp.where(mask_l, t, 0.0)
                elif dw == 1:
                    t = jnp.where(mask_r, t, 0.0)
                # 16-aligned sublane offset, 128-aligned lane offset -> tile-aligned store
                taps_ref[k * c_p:(k + 1) * c_p, col:col + HW] = t
                k += 1

    # ---- conv1: one MXU matmul  [Cout_p, 9*Cin_p] @ [9*Cin_p, Bt*HW] ----
    for b in range(Bt):
        write_taps(x_ref[b].astype(jnp.bfloat16), b, Cin_p)
    y = jnp.dot(w1_ref[...], taps_ref[0:9 * Cin_p, :],
                preferred_element_type=jnp.float32)          # [Cout_p, Bt*HW] f32

    # ---- GN1 + ReLU per image (256-lane aligned slices); build conv2 taps ----
    for b in range(Bt):
        yb = _gn_relu(y[:, b * HW:(b + 1) * HW], g1_ref[...], b1_ref[...])
        write_taps(yb.astype(jnp.bfloat16), b, Cout_p)
    z = jnp.dot(w2_ref[...], taps_ref[0:9 * Cout_p, :],
                preferred_element_type=jnp.float32)          # [Cout_p, Bt*HW] f32

    # ---- GN2 + ReLU per image; emit exactly Cout channels ----
    for b in range(Bt):
        zb = _gn_relu(z[:, b * HW:(b + 1) * HW], g2_ref[...], b2_ref[...])
        out_ref[b] = zb[0:Cout, :].astype(out_ref.dtype)


def double_conv_pallas(x_nchw, w1, g1, b1, w2, g2, b2):
    """x_nchw: [B, Cin, H, W] f32.  w*: [3, 3, Ci, Co] (HWIO).  g*/b*: [Cout]."""
    B, Cin, H, W = x_nchw.shape
    Cout = w1.shape[-1]
    HW = H * W

    # bf16 sublane tile is 16 -> 16-aligned channel blocks keep all tap offsets aligned.
    Cin_p = _round_up(Cin, 16)
    Cout_p = _round_up(Cout, 16)
    Cmax_p = max(Cin_p, Cout_p)

    Bt = _choose_images_per_step(B, HW)
    G = B // Bt

    LPAD = _round_up(W + 1, 128)                       # 128-aligned interior lane offset
    ext_w = LPAD + _round_up(HW + W + 1, 128)          # 128-aligned total strip width

    # NCHW consumed directly: [B,C,H,W] -> [B,C,H*W] is a free reshape (no pad / cast
    # HBM pass; the bf16 cast happens inside the kernel while writing the strip).
    x_flat = x_nchw.reshape(B, Cin, HW)

    def pack_w(w, cip, cop):
        ci, co = w.shape[2], w.shape[3]
        wp = jnp.pad(w, ((0, 0), (0, 0), (0, cip - ci), (0, cop - co)))
        # [3,3,Ci_p,Co_p] -> [Co_p, 9*Ci_p]; column index = (ki*3+kj)*Ci_p + ci
        return wp.reshape(9 * cip, cop).T.astype(jnp.bfloat16)

    w1m = pack_w(w1, Cin_p, Cout_p)        # [Cout_p, 9*Cin_p]
    w2m = pack_w(w2, Cout_p, Cout_p)       # [Cout_p, 9*Cout_p]

    def pack_affine(v, fill):
        return jnp.pad(v.astype(jnp.float32), (0, Cout_p - Cout),
                       constant_values=fill).reshape(Cout_p, 1)

    g1r, b1r = pack_affine(g1, 1.0), pack_affine(b1, 0.0)
    g2r, b2r = pack_affine(g2, 1.0), pack_affine(b2, 0.0)

    kernel = functools.partial(
        double_conv_kernel, H=H, W=W, Bt=Bt, Cin=Cin, Cin_p=Cin_p,
        Cout=Cout, Cout_p=Cout_p, LPAD=LPAD)

    out = pl.pallas_call(
        kernel,
        out_shape=jax.ShapeDtypeStruct((B, Cout, HW), x_nchw.dtype),
        grid_spec=pltpu.PrefetchScalarGridSpec(
            num_scalar_prefetch=0,
            grid=(G,),
            in_specs=[
                pl.BlockSpec((Bt, Cin, HW), lambda g: (g, 0, 0)),
                # grid-invariant operands: constant index_map -> fetched once.
                pl.BlockSpec((Cout_p, 9 * Cin_p), lambda g: (0, 0)),
                pl.BlockSpec((Cout_p, 1), lambda g: (0, 0)),
                pl.BlockSpec((Cout_p, 1), lambda g: (0, 0)),
                pl.BlockSpec((Cout_p, 9 * Cout_p), lambda g: (0, 0)),
                pl.BlockSpec((Cout_p, 1), lambda g: (0, 0)),
                pl.BlockSpec((Cout_p, 1), lambda g: (0, 0)),
            ],
            out_specs=pl.BlockSpec((Bt, Cout, HW), lambda g: (g, 0, 0)),
            scratch_shapes=[
                pltpu.VMEM((Cmax_p, ext_w), jnp.bfloat16),         # zero-bordered strip
                pltpu.VMEM((9 * Cmax_p, Bt * HW), jnp.bfloat16),   # im2col staging
            ],
        ),
        # TODO(synk): when scaling to real UNet shapes, re-derive Bt / channel blocks
        # against v7x's 64 MiB VMEM and set vmem_limit_bytes explicitly.
        compiler_params=pltpu.CompilerParams(
            dimension_semantics=("parallel",)),
    )(x_flat, w1m, g1r, b1r, w2m, g2r, b2r)

    return out.reshape(B, Cout, H, W)


def double_conv_ref(x, w1, g1, b1, w2, g2, b2):
    """Pure-JAX f32 reference (NCHW, HWIO weights)."""
    def conv(x, w):
        return jax.lax.conv_general_dilated(
            x, w, window_strides=(1, 1), padding=((1, 1), (1, 1)),
            dimension_numbers=('NCHW', 'HWIO', 'NCHW'))

    def gn_relu(y, g, b):
        mean = jnp.mean(y, axis=(2, 3), keepdims=True)
        var = jnp.mean((y - mean) ** 2, axis=(2, 3), keepdims=True)
        yn = (y - mean) * jax.lax.rsqrt(var + EPS)
        yn = yn * g.reshape(1, -1, 1, 1) + b.reshape(1, -1, 1, 1)
        return jnp.maximum(yn, 0.0)

    y = gn_relu(conv(x, w1), g1, b1)
    return gn_relu(conv(y, w2), g2, b2)


if __name__ == "__main__":
    # B=4 exercises the batched grid step (Bt=2 images per step, grid=(2,)).
    B, Cin, Cout, H, W = 4, 4, 8, 16, 16

    key = jax.random.PRNGKey(0)
    kx, kw1, kw2, kg1, kb1, kg2, kb2 = jax.random.split(key, 7)

    x = jax.random.normal(kx, (B, Cin, H, W), dtype=jnp.float32)

    # Conv weights (HWIO, bias=False in the module); GroupNorm affine params.
    w1 = jax.random.normal(kw1, (3, 3, Cin, Cout), dtype=jnp.float32) * 0.1
    w2 = jax.random.normal(kw2, (3, 3, Cout, Cout), dtype=jnp.float32) * 0.1
    g1 = 1.0 + 0.1 * jax.random.normal(kg1, (Cout,), dtype=jnp.float32)
    b1 = 0.1 * jax.random.normal(kb1, (Cout,), dtype=jnp.float32)
    g2 = 1.0 + 0.1 * jax.random.normal(kg2, (Cout,), dtype=jnp.float32)
    b2 = 0.1 * jax.random.normal(kb2, (Cout,), dtype=jnp.float32)

    out = jax.block_until_ready(double_conv_pallas(x, w1, g1, b1, w2, g2, b2))
    ref = jax.block_until_ready(double_conv_ref(x, w1, g1, b1, w2, g2, b2))

    assert out.shape == (B, Cout, H, W), out.shape
    # Kernel uses bf16 MXU operands (f32 accumulation, f32 GroupNorm stats), so allow
    # a slightly looser tolerance than a pure-f32 comparison.
    err = float(jnp.max(jnp.abs(out - ref)))
    assert jnp.allclose(out, ref, atol=2e-2, rtol=2e-2), err

    print("KERNEL_OK")
</pallas_src>

<mosaic_0001>
module attributes {stable_mosaic.version = 11 : i64} {
  func.func @double_conv_kernel(%arg0: i32, %arg1: memref<2x4x256xf32, #tpu.memory_space<vmem>>, %arg2: memref<16x144xbf16, #tpu.memory_space<vmem>>, %arg3: memref<16x1xf32, #tpu.memory_space<vmem>>, %arg4: memref<16x1xf32, #tpu.memory_space<vmem>>, %arg5: memref<16x144xbf16, #tpu.memory_space<vmem>>, %arg6: memref<16x1xf32, #tpu.memory_space<vmem>>, %arg7: memref<16x1xf32, #tpu.memory_space<vmem>>, %arg8: memref<2x8x256xf32, #tpu.memory_space<vmem>>, %arg9: memref<16x512xbf16, #tpu.memory_space<vmem>>, %arg10: memref<144x512xbf16, #tpu.memory_space<vmem>>) attributes {dimension_semantics = [#tpu.dimension_semantics<parallel>], iteration_bounds = array<i64: 2>, scalar_prefetch = 0 : i64, scratch_operands = 2 : i64, tpu.core_type = #tpu.core_type<tc>, window_params = [{transform_indices = @transform_0, window_bounds = array<i64: 2, 4, 256>}, {pipeline_mode = #tpu.pipeline_mode<synchronous>, transform_indices = @transform_1, window_bounds = array<i64: 16, 144>}, {pipeline_mode = #tpu.pipeline_mode<synchronous>, transform_indices = @transform_2, window_bounds = array<i64: 16, 1>}, {pipeline_mode = #tpu.pipeline_mode<synchronous>, transform_indices = @transform_3, window_bounds = array<i64: 16, 1>}, {pipeline_mode = #tpu.pipeline_mode<synchronous>, transform_indices = @transform_4, window_bounds = array<i64: 16, 144>}, {pipeline_mode = #tpu.pipeline_mode<synchronous>, transform_indices = @transform_5, window_bounds = array<i64: 16, 1>}, {pipeline_mode = #tpu.pipeline_mode<synchronous>, transform_indices = @transform_6, window_bounds = array<i64: 16, 1>}, {transform_indices = @transform_7, window_bounds = array<i64: 2, 8, 256>}]} {
    %cst = arith.constant 0.000000e+00 : bf16
    %0 = vector.broadcast %cst : bf16 to vector<16x128xbf16>
    %c0 = arith.constant 0 : index
    %c0_0 = arith.constant 0 : index
    %1 = vector.load %arg9[%c0, %c0_0] : memref<16x512xbf16, #tpu.memory_space<vmem>>, vector<16x128xbf16>
    tpu.vector_store %arg9[%c0, %c0_0], %0 {strides = array<i32>} : memref<16x512xbf16, #tpu.memory_space<vmem>>, vector<16x128xbf16>,
    %cst_1 = arith.constant 0.000000e+00 : bf16
    %2 = vector.broadcast %cst_1 : bf16 to vector<16x128xbf16>
    %c0_2 = arith.constant 0 : index
    %c384 = arith.constant 384 : index
    %3 = vector.load %arg9[%c0_2, %c384] : memref<16x512xbf16, #tpu.memory_space<vmem>>, vector<16x128xbf16>
    tpu.vector_store %arg9[%c0_2, %c384], %2 {strides = array<i32>} : memref<16x512xbf16, #tpu.memory_space<vmem>>, vector<16x128xbf16>,
    %cst_3 = arith.constant 0.000000e+00 : bf16
    %4 = vector.broadcast %cst_3 : bf16 to vector<12x512xbf16>
    %c4 = arith.constant 4 : index
    %c0_4 = arith.constant 0 : index
    %5 = vector.load %arg9[%c4, %c0_4] : memref<16x512xbf16, #tpu.memory_space<vmem>>, vector<12x512xbf16>
    tpu.vector_store %arg9[%c4, %c0_4], %4 {strides = array<i32>} : memref<16x512xbf16, #tpu.memory_space<vmem>>, vector<12x512xbf16>,
    %6 = tpu.iota {dimensions = array<i32: 1>} : vector<1x256xi32>
    %c16_i32 = arith.constant 16 : i32
    %c0_i32 = arith.constant 0 : i32
    %7 = arith.cmpi eq, %c16_i32, %c0_i32 : i32
    %c1_i32 = arith.constant 1 : i32
    %8 = arith.select %7, %c1_i32, %c16_i32 : i32
    %9 = vector.broadcast %8 : i32 to vector<1x256xi32>
    %10 = arith.remsi %6, %9 : vector<1x256xi32>
    %c0_i32_5 = arith.constant 0 : i32
    %11 = vector.broadcast %c0_i32_5 : i32 to vector<1x256xi32>
    %12 = arith.cmpi ne, %10, %11 : vector<1x256xi32>
    %c0_i32_6 = arith.constant 0 : i32
    %13 = vector.broadcast %c0_i32_6 : i32 to vector<1x256xi32>
    %14 = arith.cmpi slt, %10, %13 : vector<1x256xi32>
    %c0_i32_7 = arith.constant 0 : i32
    %15 = arith.cmpi slt, %8, %c0_i32_7 : i32
    %16 = vector.broadcast %15 : i1 to vector<1x256xi1>
    %17 = vector.broadcast %16 : vector<1x256xi1> to vector<1x256xi1>
    %18 = arith.xori %14, %17 : vector<1x256xi1>
    %19 = arith.andi %18, %12 : vector<1x256xi1>
    %20 = vector.broadcast %8 : i32 to vector<1x256xi32>
    %21 = arith.addi %10, %20 : vector<1x256xi32>
    %22 = arith.select %19, %21, %10 : vector<1x256xi1>, vector<1x256xi32>
    %c1_i32_8 = arith.constant 1 : i32
    %23 = vector.broadcast %c1_i32_8 : i32 to vector<1x256xi32>
    %24 = arith.cmpi sge, %22, %23 : vector<1x256xi32>
    %c14_i32 = arith.constant 14 : i32
    %25 = vector.broadcast %c14_i32 : i32 to vector<1x256xi32>
    %26 = arith.cmpi sle, %22, %25 : vector<1x256xi32>
    %c0_9 = arith.constant 0 : index
    %c0_10 = arith.constant 0 : index
    %c0_11 = arith.constant 0 : index
    %27 = vector.load %arg1[%c0_9, %c0_10, %c0_11] : memref<2x4x256xf32, #tpu.memory_space<vmem>>, vector<1x4x256xf32>
    %28 = vector.shape_cast %27 : vector<1x4x256xf32> to vector<4x256xf32>
    %29 = arith.truncf %28 : vector<4x256xf32> to vector<4x256xbf16>
    %c0_12 = arith.constant 0 : index
    %c128 = arith.constant 128 : index
    %30 = vector.load %arg9[%c0_12, %c128] : memref<16x512xbf16, #tpu.memory_space<vmem>>, vector<4x256xbf16>
    tpu.vector_store %arg9[%c0_12, %c128], %29 {strides = array<i32>} : memref<16x512xbf16, #tpu.memory_space<vmem>>, vector<4x256xbf16>,
    %c0_13 = arith.constant 0 : index
    %c111 = arith.constant 111 : index
    %31 = vector.load %arg9[%c0_13, %c111] : memref<16x512xbf16, #tpu.memory_space<vmem>>, vector<16x256xbf16>
    %cst_14 = arith.constant 0.000000e+00 : f32
    %32 = arith.truncf %cst_14 : f32 to bf16
    %33 = vector.shape_cast %24 : vector<1x256xi1> to vector<1x256xi1>
    %34 = vector.broadcast %33 : vector<1x256xi1> to vector<16x256xi1>
    %35 = vector.broadcast %32 : bf16 to vector<16x256xbf16>
    %36 = arith.select %34, %31, %35 : vector<16x256xi1>, vector<16x256xbf16>
    %c0_15 = arith.constant 0 : index
    %c0_16 = arith.constant 0 : index
    %37 = vector.load %arg10[%c0_15, %c0_16] : memref<144x512xbf16, #tpu.memory_space<vmem>>, vector<16x256xbf16>
    tpu.vector_store %arg10[%c0_15, %c0_16], %36 {strides = array<i32>} : memref<144x512xbf16, #tpu.memory_space<vmem>>, vector<16x256xbf16>,
    %c0_17 = arith.constant 0 : index
    %c112 = arith.constant 112 : index
    %38 = vector.load %arg9[%c0_17, %c112] : memref<16x512xbf16, #tpu.memory_space<vmem>>, vector<16x256xbf16>
    %c16 = arith.constant 16 : index
    %c0_18 = arith.constant 0 : index
    %39 = vector.load %arg10[%c16, %c0_18] : memref<144x512xbf16, #tpu.memory_space<vmem>>, vector<16x256xbf16>
    tpu.vector_store %arg10[%c16, %c0_18], %38 {strides = array<i32>} : memref<144x512xbf16, #tpu.memory_space<vmem>>, vector<16x256xbf16>,
    %c0_19 = arith.constant 0 : index
    %c113 = arith.constant 113 : index
    %40 = vector.load %arg9[%c0_19, %c113] : memref<16x512xbf16, #tpu.memory_space<vmem>>, vector<16x256xbf16>
    %cst_20 = arith.constant 0.000000e+00 : f32
    %41 = arith.truncf %cst_20 : f32 to bf16
    %42 = vector.shape_cast %26 : vector<1x256xi1> to vector<1x256xi1>
    %43 = vector.broadcast %42 : vector<1x256xi1> to vector<16x256xi1>
    %44 = vector.broadcast %41 : bf16 to vector<16x256xbf16>
    %45 = arith.select %43, %40, %44 : vector<16x256xi1>, vector<16x256xbf16>
    %c32 = arith.constant 32 : index
    %c0_21 = arith.constant 0 : index
    %46 = vector.load %arg10[%c32, %c0_21] : memref<144x512xbf16, #tpu.memory_space<vmem>>, vector<16x256xbf16>
    tpu.vector_store %arg10[%c32, %c0_21], %45 {strides = array<i32>} : memref<144x512xbf16, #tpu.memory_space<vmem>>, vector<16x256xbf16>,
    %c0_22 = arith.constant 0 : index
    %c127 = arith.constant 127 : index
    %47 = vector.load %arg9[%c0_22, %c127] : memref<16x512xbf16, #tpu.memory_space<vmem>>, vector<16x256xbf16>
    %cst_23 = arith.constant 0.000000e+00 : f32
    %48 = arith.truncf %cst_23 : f32 to bf16
    %49 = vector.shape_cast %24 : vector<1x256xi1> to vector<1x256xi1>
    %50 = vector.broadcast %49 : vector<1x256xi1> to vector<16x256xi1>
    %51 = vector.broadcast %48 : bf16 to vector<16x256xbf16>
    %52 = arith.select %50, %47, %51 : vector<16x256xi1>, vector<16x256xbf16>
    %c48 = arith.constant 48 : index
    %c0_24 = arith.constant 0 : index
    %53 = vector.load %arg10[%c48, %c0_24] : memref<144x512xbf16, #tpu.memory_space<vmem>>, vector<16x256xbf16>
    tpu.vector_store %arg10[%c48, %c0_24], %52 {strides = array<i32>} : memref<144x512xbf16, #tpu.memory_space<vmem>>, vector<16x256xbf16>,
    %c0_25 = arith.constant 0 : index
    %c128_26 = arith.constant 128 : index
    %54 = vector.load %arg9[%c0_25, %c128_26] : memref<16x512xbf16, #tpu.memory_space<vmem>>, vector<16x256xbf16>
    %c64 = arith.constant 64 : index
    %c0_27 = arith.constant 0 : index
    %55 = vector.load %arg10[%c64, %c0_27] : memref<144x512xbf16, #tpu.memory_space<vmem>>, vector<16x256xbf16>
    tpu.vector_store %arg10[%c64, %c0_27], %54 {strides = array<i32>} : memref<144x512xbf16, #tpu.memory_space<vmem>>, vector<16x256xbf16>,
    %c0_28 = arith.constant 0 : index
    %c129 = arith.constant 129 : index
    %56 = vector.load %arg9[%c0_28, %c129] : memref<16x512xbf16, #tpu.memory_space<vmem>>, vector<16x256xbf16>
    %cst_29 = arith.constant 0.000000e+00 : f32
    %57 = arith.truncf %cst_29 : f32 to bf16
    %58 = vector.shape_cast %26 : vector<1x256xi1> to vector<1x256xi1>
    %59 = vector.broadcast %58 : vector<1x256xi1> to vector<16x256xi1>
    %60 = vector.broadcast %57 : bf16 to vector<16x256xbf16>
    %61 = arith.select %59, %56, %60 : vector<16x256xi1>, vector<16x256xbf16>
    %c80 = arith.constant 80 : index
    %c0_30 = arith.constant 0 : index
    %62 = vector.load %arg10[%c80, %c0_30] : memref<144x512xbf16, #tpu.memory_space<vmem>>, vector<16x256xbf16>
    tpu.vector_store %arg10[%c80, %c0_30], %61 {strides = array<i32>} : memref<144x512xbf16, #tpu.memory_space<vmem>>, vector<16x256xbf16>,
    %c0_31 = arith.constant 0 : index
    %c143 = arith.constant 143 : index
    %63 = vector.load %arg9[%c0_31, %c143] : memref<16x512xbf16, #tpu.memory_space<vmem>>, vector<16x256xbf16>
    %cst_32 = arith.constant 0.000000e+00 : f32
    %64 = arith.truncf %cst_32 : f32 to bf16
    %65 = vector.shape_cast %24 : vector<1x256xi1> to vector<1x256xi1>
    %66 = vector.broadcast %65 : vector<1x256xi1> to vector<16x256xi1>
    %67 = vector.broadcast %64 : bf16 to vector<16x256xbf16>
    %68 = arith.select %66, %63, %67 : vector<16x256xi1>, vector<16x256xbf16>
    %c96 = arith.constant 96 : index
    %c0_33 = arith.constant 0 : index
    %69 = vector.load %arg10[%c96, %c0_33] : memref<144x512xbf16, #tpu.memory_space<vmem>>, vector<16x256xbf16>
    tpu.vector_store %arg10[%c96, %c0_33], %68 {strides = array<i32>} : memref<144x512xbf16, #tpu.memory_space<vmem>>, vector<16x256xbf16>,
    %c0_34 = arith.constant 0 : index
    %c144 = arith.constant 144 : index
    %70 = vector.load %arg9[%c0_34, %c144] : memref<16x512xbf16, #tpu.memory_space<vmem>>, vector<16x256xbf16>
    %c112_35 = arith.constant 112 : index
    %c0_36 = arith.constant 0 : index
    %71 = vector.load %arg10[%c112_35, %c0_36] : memref<144x512xbf16, #tpu.memory_space<vmem>>, vector<16x256xbf16>
    tpu.vector_store %arg10[%c112_35, %c0_36], %70 {strides = array<i32>} : memref<144x512xbf16, #tpu.memory_space<vmem>>, vector<16x256xbf16>,
    %c0_37 = arith.constant 0 : index
    %c145 = arith.constant 145 : index
    %72 = vector.load %arg9[%c0_37, %c145] : memref<16x512xbf16, #tpu.memory_space<vmem>>, vector<16x256xbf16>
    %cst_38 = arith.constant 0.000000e+00 : f32
    %73 = arith.truncf %cst_38 : f32 to bf16
    %74 = vector.shape_cast %26 : vector<1x256xi1> to vector<1x256xi1>
    %75 = vector.broadcast %74 : vector<1x256xi1> to vector<16x256xi1>
    %76 = vector.broadcast %73 : bf16 to vector<16x256xbf16>
    %77 = arith.select %75, %72, %76 : vector<16x256xi1>, vector<16x256xbf16>
    %c128_39 = arith.constant 128 : index
    %c0_40 = arith.constant 0 : index
    %78 = vector.load %arg10[%c128_39, %c0_40] : memref<144x512xbf16, #tpu.memory_space<vmem>>, vector<16x256xbf16>
    tpu.vector_store %arg10[%c128_39, %c0_40], %77 {strides = array<i32>} : memref<144x512xbf16, #tpu.memory_space<vmem>>, vector<16x256xbf16>,
    %c1 = arith.constant 1 : index
    %c0_41 = arith.constant 0 : index
    %c0_42 = arith.constant 0 : index
    %79 = vector.load %arg1[%c1, %c0_41, %c0_42] : memref<2x4x256xf32, #tpu.memory_space<vmem>>, vector<1x4x256xf32>
    %80 = vector.shape_cast %79 : vector<1x4x256xf32> to vector<4x256xf32>
    %81 = arith.truncf %80 : vector<4x256xf32> to vector<4x256xbf16>
    %c0_43 = arith.constant 0 : index
    %c128_44 = arith.constant 128 : index
    %82 = vector.load %arg9[%c0_43, %c128_44] : memref<16x512xbf16, #tpu.memory_space<vmem>>, vector<4x256xbf16>
    tpu.vector_store %arg9[%c0_43, %c128_44], %81 {strides = array<i32>} : memref<16x512xbf16, #tpu.memory_space<vmem>>, vector<4x256xbf16>,
    %c0_45 = arith.constant 0 : index
    %c111_46 = arith.constant 111 : index
    %83 = vector.load %arg9[%c0_45, %c111_46] : memref<16x512xbf16, #tpu.memory_space<vmem>>, vector<16x256xbf16>
    %cst_47 = arith.constant 0.000000e+00 : f32
    %84 = arith.truncf %cst_47 : f32 to bf16
    %85 = vector.shape_cast %24 : vector<1x256xi1> to vector<1x256xi1>
    %86 = vector.broadcast %85 : vector<1x256xi1> to vector<16x256xi1>
    %87 = vector.broadcast %84 : bf16 to vector<16x256xbf16>
    %88 = arith.select %86, %83, %87 : vector<16x256xi1>, vector<16x256xbf16>
    %c0_48 = arith.constant 0 : index
    %c256 = arith.constant 256 : index
    %89 = vector.load %arg10[%c0_48, %c256] : memref<144x512xbf16, #tpu.memory_space<vmem>>, vector<16x256xbf16>
    tpu.vector_store %arg10[%c0_48, %c256], %88 {strides = array<i32>} : memref<144x512xbf16, #tpu.memory_space<vmem>>, vector<16x256xbf16>,
    %c0_49 = arith.constant 0 : index
    %c112_50 = arith.constant 112 : index
    %90 = vector.load %arg9[%c0_49, %c112_50] : memref<16x512xbf16, #tpu.memory_space<vmem>>, vector<16x256xbf16>
    %c16_51 = arith.constant 16 : index
    %c256_52 = arith.constant 256 : index
    %91 = vector.load %arg10[%c16_51, %c256_52] : memref<144x512xbf16, #tpu.memory_space<vmem>>, vector<16x256xbf16>
    tpu.vector_store %arg10[%c16_51, %c256_52], %90 {strides = array<i32>} : memref<144x512xbf16, #tpu.memory_space<vmem>>, vector<16x256xbf16>,
    %c0_53 = arith.constant 0 : index
    %c113_54 = arith.constant 113 : index
    %92 = vector.load %arg9[%c0_53, %c113_54] : memref<16x512xbf16, #tpu.memory_space<vmem>>, vector<16x256xbf16>
    %cst_55 = arith.constant 0.000000e+00 : f32
    %93 = arith.truncf %cst_55 : f32 to bf16
    %94 = vector.shape_cast %26 : vector<1x256xi1> to vector<1x256xi1>
    %95 = vector.broadcast %94 : vector<1x256xi1> to vector<16x256xi1>
    %96 = vector.broadcast %93 : bf16 to vector<16x256xbf16>
    %97 = arith.select %95, %92, %96 : vector<16x256xi1>, vector<16x256xbf16>
    %c32_56 = arith.constant 32 : index
    %c256_57 = arith.constant 256 : index
    %98 = vector.load %arg10[%c32_56, %c256_57] : memref<144x512xbf16, #tpu.memory_space<vmem>>, vector<16x256xbf16>
    tpu.vector_store %arg10[%c32_56, %c256_57], %97 {strides = array<i32>} : memref<144x512xbf16, #tpu.memory_space<vmem>>, vector<16x256xbf16>,
    %c0_58 = arith.constant 0 : index
    %c127_59 = arith.constant 127 : index
    %99 = vector.load %arg9[%c0_58, %c127_59] : memref<16x512xbf16, #tpu.memory_space<vmem>>, vector<16x256xbf16>
    %cst_60 = arith.constant 0.000000e+00 : f32
    %100 = arith.truncf %cst_60 : f32 to bf16
    %101 = vector.shape_cast %24 : vector<1x256xi1> to vector<1x256xi1>
    %102 = vector.broadcast %101 : vector<1x256xi1> to vector<16x256xi1>
    %103 = vector.broadcast %100 : bf16 to vector<16x256xbf16>
    %104 = arith.select %102, %99, %103 : vector<16x256xi1>, vector<16x256xbf16>
    %c48_61 = arith.constant 48 : index
    %c256_62 = arith.constant 256 : index
    %105 = vector.load %arg10[%c48_61, %c256_62] : memref<144x512xbf16, #tpu.memory_space<vmem>>, vector<16x256xbf16>
    tpu.vector_store %arg10[%c48_61, %c256_62], %104 {strides = array<i32>} : memref<144x512xbf16, #tpu.memory_space<vmem>>, vector<16x256xbf16>,
    %c0_63 = arith.constant 0 : index
    %c128_64 = arith.constant 128 : index
    %106 = vector.load %arg9[%c0_63, %c128_64] : memref<16x512xbf16, #tpu.memory_space<vmem>>, vector<16x256xbf16>
    %c64_65 = arith.constant 64 : index
    %c256_66 = arith.constant 256 : index
    %107 = vector.load %arg10[%c64_65, %c256_66] : memref<144x512xbf16, #tpu.memory_space<vmem>>, vector<16x256xbf16>
    tpu.vector_store %arg10[%c64_65, %c256_66], %106 {strides = array<i32>} : memref<144x512xbf16, #tpu.memory_space<vmem>>, vector<16x256xbf16>,
    %c0_67 = arith.constant 0 : index
    %c129_68 = arith.constant 129 : index
    %108 = vector.load %arg9[%c0_67, %c129_68] : memref<16x512xbf16, #tpu.memory_space<vmem>>, vector<16x256xbf16>
    %cst_69 = arith.constant 0.000000e+00 : f32
    %109 = arith.truncf %cst_69 : f32 to bf16
    %110 = vector.shape_cast %26 : vector<1x256xi1> to vector<1x256xi1>
    %111 = vector.broadcast %110 : vector<1x256xi1> to vector<16x256xi1>
    %112 = vector.broadcast %109 : bf16 to vector<16x256xbf16>
    %113 = arith.select %111, %108, %112 : vector<16x256xi1>, vector<16x256xbf16>
    %c80_70 = arith.constant 80 : index
    %c256_71 = arith.constant 256 : index
    %114 = vector.load %arg10[%c80_70, %c256_71] : memref<144x512xbf16, #tpu.memory_space<vmem>>, vector<16x256xbf16>
    tpu.vector_store %arg10[%c80_70, %c256_71], %113 {strides = array<i32>} : memref<144x512xbf16, #tpu.memory_space<vmem>>, vector<16x256xbf16>,
    %c0_72 = arith.constant 0 : index
    %c143_73 = arith.constant 143 : index
    %115 = vector.load %arg9[%c0_72, %c143_73] : memref<16x512xbf16, #tpu.memory_space<vmem>>, vector<16x256xbf16>
    %cst_74 = arith.constant 0.000000e+00 : f32
    %116 = arith.truncf %cst_74 : f32 to bf16
    %117 = vector.shape_cast %24 : vector<1x256xi1> to vector<1x256xi1>
    %118 = vector.broadcast %117 : vector<1x256xi1> to vector<16x256xi1>
    %119 = vector.broadcast %116 : bf16 to vector<16x256xbf16>
    %120 = arith.select %118, %115, %119 : vector<16x256xi1>, vector<16x256xbf16>
    %c96_75 = arith.constant 96 : index
    %c256_76 = arith.constant 256 : index
    %121 = vector.load %arg10[%c96_75, %c256_76] : memref<144x512xbf16, #tpu.memory_space<vmem>>, vector<16x256xbf16>
    tpu.vector_store %arg10[%c96_75, %c256_76], %120 {strides = array<i32>} : memref<144x512xbf16, #tpu.memory_space<vmem>>, vector<16x256xbf16>,
    %c0_77 = arith.constant 0 : index
    %c144_78 = arith.constant 144 : index
    %122 = vector.load %arg9[%c0_77, %c144_78] : memref<16x512xbf16, #tpu.memory_space<vmem>>, vector<16x256xbf16>
    %c112_79 = arith.constant 112 : index
    %c256_80 = arith.constant 256 : index
    %123 = vector.load %arg10[%c112_79, %c256_80] : memref<144x512xbf16, #tpu.memory_space<vmem>>, vector<16x256xbf16>
    tpu.vector_store %arg10[%c112_79, %c256_80], %122 {strides = array<i32>} : memref<144x512xbf16, #tpu.memory_space<vmem>>, vector<16x256xbf16>,
    %c0_81 = arith.constant 0 : index
    %c145_82 = arith.constant 145 : index
    %124 = vector.load %arg9[%c0_81, %c145_82] : memref<16x512xbf16, #tpu.memory_space<vmem>>, vector<16x256xbf16>
    %cst_83 = arith.constant 0.000000e+00 : f32
    %125 = arith.truncf %cst_83 : f32 to bf16
    %126 = vector.shape_cast %26 : vector<1x256xi1> to vector<1x256xi1>
    %127 = vector.broadcast %126 : vector<1x256xi1> to vector<16x256xi1>
    %128 = vector.broadcast %125 : bf16 to vector<16x256xbf16>
    %129 = arith.select %127, %124, %128 : vector<16x256xi1>, vector<16x256xbf16>
    %c128_84 = arith.constant 128 : index
    %c256_85 = arith.constant 256 : index
    %130 = vector.load %arg10[%c128_84, %c256_85] : memref<144x512xbf16, #tpu.memory_space<vmem>>, vector<16x256xbf16>
    tpu.vector_store %arg10[%c128_84, %c256_85], %129 {strides = array<i32>} : memref<144x512xbf16, #tpu.memory_space<vmem>>, vector<16x256xbf16>,
    %c0_86 = arith.constant 0 : index
    %c0_87 = arith.constant 0 : index
    %131 = vector.load %arg2[%c0_86, %c0_87] : memref<16x144xbf16, #tpu.memory_space<vmem>>, vector<16x144xbf16>
    %c0_88 = arith.constant 0 : index
    %c0_89 = arith.constant 0 : index
    %132 = vector.load %arg10[%c0_88, %c0_89] : memref<144x512xbf16, #tpu.memory_space<vmem>>, vector<144x512xbf16>
    %cst_90 = arith.constant dense<0.000000e+00> : vector<16x512xf32>
    %133 = tpu.matmul %131, %132, %cst_90 {dimension_numbers = #tpu.dot_dimension_numbers<[1], [0], [0], [1], [0, 0, 1, 1], [], []>} : vector<16x144xbf16>, vector<144x512xbf16>, vector<16x512xf32> -> vector<16x512xf32>
    %134 = vector.extract_strided_slice %133 {offsets = [0, 0], sizes = [16, 256], strides = [1, 1]} : vector<16x512xf32> to vector<16x256xf32>
    %c0_91 = arith.constant 0 : index
    %c0_92 = arith.constant 0 : index
    %135 = vector.load %arg3[%c0_91, %c0_92] : memref<16x1xf32, #tpu.memory_space<vmem>>, vector<16x1xf32>
    %c0_93 = arith.constant 0 : index
    %c0_94 = arith.constant 0 : index
    %136 = vector.load %arg4[%c0_93, %c0_94] : memref<16x1xf32, #tpu.memory_space<vmem>>, vector<16x1xf32>
    %cst_95 = arith.constant dense<0.000000e+00> : vector<16xf32>
    %137 = vector.multi_reduction <add>, %134, %cst_95 [1] : vector<16x256xf32> to vector<16xf32>
    %138 = vector.shape_cast %137 : vector<16xf32> to vector<16x1xf32>
    %cst_96 = arith.constant 2.560000e+02 : f32
    %139 = vector.broadcast %cst_96 : f32 to vector<16x1xf32>
    %140 = arith.divf %138, %139 : vector<16x1xf32>
    %141 = vector.broadcast %140 : vector<16x1xf32> to vector<16x256xf32>
    %142 = arith.subf %134, %141 : vector<16x256xf32>
    %143 = arith.mulf %142, %142 : vector<16x256xf32>
    %cst_97 = arith.constant dense<0.000000e+00> : vector<16xf32>
    %144 = vector.multi_reduction <add>, %143, %cst_97 [1] : vector<16x256xf32> to vector<16xf32>
    %145 = vector.shape_cast %144 : vector<16xf32> to vector<16x1xf32>
    %cst_98 = arith.constant 2.560000e+02 : f32
    %146 = vector.broadcast %cst_98 : f32 to vector<16x1xf32>
    %147 = arith.divf %145, %146 : vector<16x1xf32>
    %cst_99 = arith.constant 9.99999974E-6 : f32
    %148 = vector.broadcast %cst_99 : f32 to vector<16x1xf32>
    %149 = arith.addf %147, %148 : vector<16x1xf32>
    %150 = math.rsqrt %149 : vector<16x1xf32>
    %151 = vector.broadcast %150 : vector<16x1xf32> to vector<16x256xf32>
    %152 = arith.mulf %142, %151 : vector<16x256xf32>
    %153 = vector.broadcast %135 : vector<16x1xf32> to vector<16x256xf32>
    %154 = arith.mulf %152, %153 : vector<16x256xf32>
    %155 = vector.broadcast %136 : vector<16x1xf32> to vector<16x256xf32>
    %156 = arith.addf %154, %155 : vector<16x256xf32>
    %cst_100 = arith.constant 0.000000e+00 : f32
    %157 = vector.broadcast %cst_100 : f32 to vector<16x256xf32>
    %158 = arith.maximumf %156, %157 : vector<16x256xf32>
    %159 = arith.truncf %158 : vector<16x256xf32> to vector<16x256xbf16>
    %c0_101 = arith.constant 0 : index
    %c128_102 = arith.constant 128 : index
    %160 = vector.load %arg9[%c0_101, %c128_102] : memref<16x512xbf16, #tpu.memory_space<vmem>>, vector<16x256xbf16>
    tpu.vector_store %arg9[%c0_101, %c128_102], %159 {strides = array<i32>} : memref<16x512xbf16, #tpu.memory_space<vmem>>, vector<16x256xbf16>,
    %c0_103 = arith.constant 0 : index
    %c111_104 = arith.constant 111 : index
    %161 = vector.load %arg9[%c0_103, %c111_104] : memref<16x512xbf16, #tpu.memory_space<vmem>>, vector<16x256xbf16>
    %cst_105 = arith.constant 0.000000e+00 : f32
    %162 = arith.truncf %cst_105 : f32 to bf16
    %163 = vector.shape_cast %24 : vector<1x256xi1> to vector<1x256xi1>
    %164 = vector.broadcast %163 : vector<1x256xi1> to vector<16x256xi1>
    %165 = vector.broadcast %162 : bf16 to vector<16x256xbf16>
    %166 = arith.select %164, %161, %165 : vector<16x256xi1>, vector<16x256xbf16>
    %c0_106 = arith.constant 0 : index
    %c0_107 = arith.constant 0 : index
    %167 = vector.load %arg10[%c0_106, %c0_107] : memref<144x512xbf16, #tpu.memory_space<vmem>>, vector<16x256xbf16>
    tpu.vector_store %arg10[%c0_106, %c0_107], %166 {strides = array<i32>} : memref<144x512xbf16, #tpu.memory_space<vmem>>, vector<16x256xbf16>,
    %c0_108 = arith.constant 0 : index
    %c112_109 = arith.constant 112 : index
    %168 = vector.load %arg9[%c0_108, %c112_109] : memref<16x512xbf16, #tpu.memory_space<vmem>>, vector<16x256xbf16>
    %c16_110 = arith.constant 16 : index
    %c0_111 = arith.constant 0 : index
    %169 = vector.load %arg10[%c16_110, %c0_111] : memref<144x512xbf16, #tpu.memory_space<vmem>>, vector<16x256xbf16>
    tpu.vector_store %arg10[%c16_110, %c0_111], %168 {strides = array<i32>} : memref<144x512xbf16, #tpu.memory_space<vmem>>, vector<16x256xbf16>,
    %c0_112 = arith.constant 0 : index
    %c113_113 = arith.constant 113 : index
    %170 = vector.load %arg9[%c0_112, %c113_113] : memref<16x512xbf16, #tpu.memory_space<vmem>>, vector<16x256xbf16>
    %cst_114 = arith.constant 0.000000e+00 : f32
    %171 = arith.truncf %cst_114 : f32 to bf16
    %172 = vector.shape_cast %26 : vector<1x256xi1> to vector<1x256xi1>
    %173 = vector.broadcast %172 : vector<1x256xi1> to vector<16x256xi1>
    %174 = vector.broadcast %171 : bf16 to vector<16x256xbf16>
    %175 = arith.select %173, %170, %174 : vector<16x256xi1>, vector<16x256xbf16>
    %c32_115 = arith.constant 32 : index
    %c0_116 = arith.constant 0 : index
    %176 = vector.load %arg10[%c32_115, %c0_116] : memref<144x512xbf16, #tpu.memory_space<vmem>>, vector<16x256xbf16>
    tpu.vector_store %arg10[%c32_115, %c0_116], %175 {strides = array<i32>} : memref<144x512xbf16, #tpu.memory_space<vmem>>, vector<16x256xbf16>,
    %c0_117 = arith.constant 0 : index
    %c127_118 = arith.constant 127 : index
    %177 = vector.load %arg9[%c0_117, %c127_118] : memref<16x512xbf16, #tpu.memory_space<vmem>>, vector<16x256xbf16>
    %cst_119 = arith.constant 0.000000e+00 : f32
    %178 = arith.truncf %cst_119 : f32 to bf16
    %179 = vector.shape_cast %24 : vector<1x256xi1> to vector<1x256xi1>
    %180 = vector.broadcast %179 : vector<1x256xi1> to vector<16x256xi1>
    %181 = vector.broadcast %178 : bf16 to vector<16x256xbf16>
    %182 = arith.select %180, %177, %181 : vector<16x256xi1>, vector<16x256xbf16>
    %c48_120 = arith.constant 48 : index
    %c0_121 = arith.constant 0 : index
    %183 = vector.load %arg10[%c48_120, %c0_121] : memref<144x512xbf16, #tpu.memory_space<vmem>>, vector<16x256xbf16>
    tpu.vector_store %arg10[%c48_120, %c0_121], %182 {strides = array<i32>} : memref<144x512xbf16, #tpu.memory_space<vmem>>, vector<16x256xbf16>,
    %c0_122 = arith.constant 0 : index
    %c128_123 = arith.constant 128 : index
    %184 = vector.load %arg9[%c0_122, %c128_123] : memref<16x512xbf16, #tpu.memory_space<vmem>>, vector<16x256xbf16>
    %c64_124 = arith.constant 64 : index
    %c0_125 = arith.constant 0 : index
    %185 = vector.load %arg10[%c64_124, %c0_125] : memref<144x512xbf16, #tpu.memory_space<vmem>>, vector<16x256xbf16>
    tpu.vector_store %arg10[%c64_124, %c0_125], %184 {strides = array<i32>} : memref<144x512xbf16, #tpu.memory_space<vmem>>, vector<16x256xbf16>,
    %c0_126 = arith.constant 0 : index
    %c129_127 = arith.constant 129 : index
    %186 = vector.load %arg9[%c0_126, %c129_127] : memref<16x512xbf16, #tpu.memory_space<vmem>>, vector<16x256xbf16>
    %cst_128 = arith.constant 0.000000e+00 : f32
    %187 = arith.truncf %cst_128 : f32 to bf16
    %188 = vector.shape_cast %26 : vector<1x256xi1> to vector<1x256xi1>
    %189 = vector.broadcast %188 : vector<1x256xi1> to vector<16x256xi1>
    %190 = vector.broadcast %187 : bf16 to vector<16x256xbf16>
    %191 = arith.select %189, %186, %190 : vector<16x256xi1>, vector<16x256xbf16>
    %c80_129 = arith.constant 80 : index
    %c0_130 = arith.constant 0 : index
    %192 = vector.load %arg10[%c80_129, %c0_130] : memref<144x512xbf16, #tpu.memory_space<vmem>>, vector<16x256xbf16>
    tpu.vector_store %arg10[%c80_129, %c0_130], %191 {strides = array<i32>} : memref<144x512xbf16, #tpu.memory_space<vmem>>, vector<16x256xbf16>,
    %c0_131 = arith.constant 0 : index
    %c143_132 = arith.constant 143 : index
    %193 = vector.load %arg9[%c0_131, %c143_132] : memref<16x512xbf16, #tpu.memory_space<vmem>>, vector<16x256xbf16>
    %cst_133 = arith.constant 0.000000e+00 : f32
    %194 = arith.truncf %cst_133 : f32 to bf16
    %195 = vector.shape_cast %24 : vector<1x256xi1> to vector<1x256xi1>
    %196 = vector.broadcast %195 : vector<1x256xi1> to vector<16x256xi1>
    %197 = vector.broadcast %194 : bf16 to vector<16x256xbf16>
    %198 = arith.select %196, %193, %197 : vector<16x256xi1>, vector<16x256xbf16>
    %c96_134 = arith.constant 96 : index
    %c0_135 = arith.constant 0 : index
    %199 = vector.load %arg10[%c96_134, %c0_135] : memref<144x512xbf16, #tpu.memory_space<vmem>>, vector<16x256xbf16>
    tpu.vector_store %arg10[%c96_134, %c0_135], %198 {strides = array<i32>} : memref<144x512xbf16, #tpu.memory_space<vmem>>, vector<16x256xbf16>,
    %c0_136 = arith.constant 0 : index
    %c144_137 = arith.constant 144 : index
    %200 = vector.load %arg9[%c0_136, %c144_137] : memref<16x512xbf16, #tpu.memory_space<vmem>>, vector<16x256xbf16>
    %c112_138 = arith.constant 112 : index
    %c0_139 = arith.constant 0 : index
    %201 = vector.load %arg10[%c112_138, %c0_139] : memref<144x512xbf16, #tpu.memory_space<vmem>>, vector<16x256xbf16>
    tpu.vector_store %arg10[%c112_138, %c0_139], %200 {strides = array<i32>} : memref<144x512xbf16, #tpu.memory_space<vmem>>, vector<16x256xbf16>,
    %c0_140 = arith.constant 0 : index
    %c145_141 = arith.constant 145 : index
    %202 = vector.load %arg9[%c0_140, %c145_141] : memref<16x512xbf16, #tpu.memory_space<vmem>>, vector<16x256xbf16>
    %cst_142 = arith.constant 0.000000e+00 : f32
    %203 = arith.truncf %cst_142 : f32 to bf16
    %204 = vector.shape_cast %26 : vector<1x256xi1> to vector<1x256xi1>
    %205 = vector.broadcast %204 : vector<1x256xi1> to vector<16x256xi1>
    %206 = vector.broadcast %203 : bf16 to vector<16x256xbf16>
    %207 = arith.select %205, %202, %206 : vector<16x256xi1>, vector<16x256xbf16>
    %c128_143 = arith.constant 128 : index
    %c0_144 = arith.constant 0 : index
    %208 = vector.load %arg10[%c128_143, %c0_144] : memref<144x512xbf16, #tpu.memory_space<vmem>>, vector<16x256xbf16>
    tpu.vector_store %arg10[%c128_143, %c0_144], %207 {strides = array<i32>} : memref<144x512xbf16, #tpu.memory_space<vmem>>, vector<16x256xbf16>,
    %209 = vector.extract_strided_slice %133 {offsets = [0, 256], sizes = [16, 256], strides = [1, 1]} : vector<16x512xf32> to vector<16x256xf32>
    %c0_145 = arith.constant 0 : index
    %c0_146 = arith.constant 0 : index
    %210 = vector.load %arg3[%c0_145, %c0_146] : memref<16x1xf32, #tpu.memory_space<vmem>>, vector<16x1xf32>
    %c0_147 = arith.constant 0 : index
    %c0_148 = arith.constant 0 : index
    %211 = vector.load %arg4[%c0_147, %c0_148] : memref<16x1xf32, #tpu.memory_space<vmem>>, vector<16x1xf32>
    %cst_149 = arith.constant dense<0.000000e+00> : vector<16xf32>
    %212 = vector.multi_reduction <add>, %209, %cst_149 [1] : vector<16x256xf32> to vector<16xf32>
    %213 = vector.shape_cast %212 : vector<16xf32> to vector<16x1xf32>
    %cst_150 = arith.constant 2.560000e+02 : f32
    %214 = vector.broadcast %cst_150 : f32 to vector<16x1xf32>
    %215 = arith.divf %213, %214 : vector<16x1xf32>
    %216 = vector.broadcast %215 : vector<16x1xf32> to vector<16x256xf32>
    %217 = arith.subf %209, %216 : vector<16x256xf32>
    %218 = arith.mulf %217, %217 : vector<16x256xf32>
    %cst_151 = arith.constant dense<0.000000e+00> : vector<16xf32>
    %219 = vector.multi_reduction <add>, %218, %cst_151 [1] : vector<16x256xf32> to vector<16xf32>
    %220 = vector.shape_cast %219 : vector<16xf32> to vector<16x1xf32>
    %cst_152 = arith.constant 2.560000e+02 : f32
    %221 = vector.broadcast %cst_152 : f32 to vector<16x1xf32>
    %222 = arith.divf %220, %221 : vector<16x1xf32>
    %cst_153 = arith.constant 9.99999974E-6 : f32
    %223 = vector.broadcast %cst_153 : f32 to vector<16x1xf32>
    %224 = arith.addf %222, %223 : vector<16x1xf32>
    %225 = math.rsqrt %224 : vector<16x1xf32>
    %226 = vector.broadcast %225 : vector<16x1xf32> to vector<16x256xf32>
    %227 = arith.mulf %217, %226 : vector<16x256xf32>
    %228 = vector.broadcast %210 : vector<16x1xf32> to vector<16x256xf32>
    %229 = arith.mulf %227, %228 : vector<16x256xf32>
    %230 = vector.broadcast %211 : vector<16x1xf32> to vector<16x256xf32>
    %231 = arith.addf %229, %230 : vector<16x256xf32>
    %cst_154 = arith.constant 0.000000e+00 : f32
    %232 = vector.broadcast %cst_154 : f32 to vector<16x256xf32>
    %233 = arith.maximumf %231, %232 : vector<16x256xf32>
    %234 = arith.truncf %233 : vector<16x256xf32> to vector<16x256xbf16>
    %c0_155 = arith.constant 0 : index
    %c128_156 = arith.constant 128 : index
    %235 = vector.load %arg9[%c0_155, %c128_156] : memref<16x512xbf16, #tpu.memory_space<vmem>>, vector<16x256xbf16>
    tpu.vector_store %arg9[%c0_155, %c128_156], %234 {strides = array<i32>} : memref<16x512xbf16, #tpu.memory_space<vmem>>, vector<16x256xbf16>,
    %c0_157 = arith.constant 0 : index
    %c111_158 = arith.constant 111 : index
    %236 = vector.load %arg9[%c0_157, %c111_158] : memref<16x512xbf16, #tpu.memory_space<vmem>>, vector<16x256xbf16>
    %cst_159 = arith.constant 0.000000e+00 : f32
    %237 = arith.truncf %cst_159 : f32 to bf16
    %238 = vector.shape_cast %24 : vector<1x256xi1> to vector<1x256xi1>
    %239 = vector.broadcast %238 : vector<1x256xi1> to vector<16x256xi1>
    %240 = vector.broadcast %237 : bf16 to vector<16x256xbf16>
    %241 = arith.select %239, %236, %240 : vector<16x256xi1>, vector<16x256xbf16>
    %c0_160 = arith.constant 0 : index
    %c256_161 = arith.constant 256 : index
    %242 = vector.load %arg10[%c0_160, %c256_161] : memref<144x512xbf16, #tpu.memory_space<vmem>>, vector<16x256xbf16>
    tpu.vector_store %arg10[%c0_160, %c256_161], %241 {strides = array<i32>} : memref<144x512xbf16, #tpu.memory_space<vmem>>, vector<16x256xbf16>,
    %c0_162 = arith.constant 0 : index
    %c112_163 = arith.constant 112 : index
    %243 = vector.load %arg9[%c0_162, %c112_163] : memref<16x512xbf16, #tpu.memory_space<vmem>>, vector<16x256xbf16>
    %c16_164 = arith.constant 16 : index
    %c256_165 = arith.constant 256 : index
    %244 = vector.load %arg10[%c16_164, %c256_165] : memref<144x512xbf16, #tpu.memory_space<vmem>>, vector<16x256xbf16>
    tpu.vector_store %arg10[%c16_164, %c256_165], %243 {strides = array<i32>} : memref<144x512xbf16, #tpu.memory_space<vmem>>, vector<16x256xbf16>,
    %c0_166 = arith.constant 0 : index
    %c113_167 = arith.constant 113 : index
    %245 = vector.load %arg9[%c0_166, %c113_167] : memref<16x512xbf16, #tpu.memory_space<vmem>>, vector<16x256xbf16>
    %cst_168 = arith.constant 0.000000e+00 : f32
    %246 = arith.truncf %cst_168 : f32 to bf16
    %247 = vector.shape_cast %26 : vector<1x256xi1> to vector<1x256xi1>
    %248 = vector.broadcast %247 : vector<1x256xi1> to vector<16x256xi1>
    %249 = vector.broadcast %246 : bf16 to vector<16x256xbf16>
    %250 = arith.select %248, %245, %249 : vector<16x256xi1>, vector<16x256xbf16>
    %c32_169 = arith.constant 32 : index
    %c256_170 = arith.constant 256 : index
    %251 = vector.load %arg10[%c32_169, %c256_170] : memref<144x512xbf16, #tpu.memory_space<vmem>>, vector<16x256xbf16>
    tpu.vector_store %arg10[%c32_169, %c256_170], %250 {strides = array<i32>} : memref<144x512xbf16, #tpu.memory_space<vmem>>, vector<16x256xbf16>,
    %c0_171 = arith.constant 0 : index
    %c127_172 = arith.constant 127 : index
    %252 = vector.load %arg9[%c0_171, %c127_172] : memref<16x512xbf16, #tpu.memory_space<vmem>>, vector<16x256xbf16>
    %cst_173 = arith.constant 0.000000e+00 : f32
    %253 = arith.truncf %cst_173 : f32 to bf16
    %254 = vector.shape_cast %24 : vector<1x256xi1> to vector<1x256xi1>
    %255 = vector.broadcast %254 : vector<1x256xi1> to vector<16x256xi1>
    %256 = vector.broadcast %253 : bf16 to vector<16x256xbf16>
    %257 = arith.select %255, %252, %256 : vector<16x256xi1>, vector<16x256xbf16>
    %c48_174 = arith.constant 48 : index
    %c256_175 = arith.constant 256 : index
    %258 = vector.load %arg10[%c48_174, %c256_175] : memref<144x512xbf16, #tpu.memory_space<vmem>>, vector<16x256xbf16>
    tpu.vector_store %arg10[%c48_174, %c256_175], %257 {strides = array<i32>} : memref<144x512xbf16, #tpu.memory_space<vmem>>, vector<16x256xbf16>,
    %c0_176 = arith.constant 0 : index
    %c128_177 = arith.constant 128 : index
    %259 = vector.load %arg9[%c0_176, %c128_177] : memref<16x512xbf16, #tpu.memory_space<vmem>>, vector<16x256xbf16>
    %c64_178 = arith.constant 64 : index
    %c256_179 = arith.constant 256 : index
    %260 = vector.load %arg10[%c64_178, %c256_179] : memref<144x512xbf16, #tpu.memory_space<vmem>>, vector<16x256xbf16>
    tpu.vector_store %arg10[%c64_178, %c256_179], %259 {strides = array<i32>} : memref<144x512xbf16, #tpu.memory_space<vmem>>, vector<16x256xbf16>,
    %c0_180 = arith.constant 0 : index
    %c129_181 = arith.constant 129 : index
    %261 = vector.load %arg9[%c0_180, %c129_181] : memref<16x512xbf16, #tpu.memory_space<vmem>>, vector<16x256xbf16>
    %cst_182 = arith.constant 0.000000e+00 : f32
    %262 = arith.truncf %cst_182 : f32 to bf16
    %263 = vector.shape_cast %26 : vector<1x256xi1> to vector<1x256xi1>
    %264 = vector.broadcast %263 : vector<1x256xi1> to vector<16x256xi1>
    %265 = vector.broadcast %262 : bf16 to vector<16x256xbf16>
    %266 = arith.select %264, %261, %265 : vector<16x256xi1>, vector<16x256xbf16>
    %c80_183 = arith.constant 80 : index
    %c256_184 = arith.constant 256 : index
    %267 = vector.load %arg10[%c80_183, %c256_184] : memref<144x512xbf16, #tpu.memory_space<vmem>>, vector<16x256xbf16>
    tpu.vector_store %arg10[%c80_183, %c256_184], %266 {strides = array<i32>} : memref<144x512xbf16, #tpu.memory_space<vmem>>, vector<16x256xbf16>,
    %c0_185 = arith.constant 0 : index
    %c143_186 = arith.constant 143 : index
    %268 = vector.load %arg9[%c0_185, %c143_186] : memref<16x512xbf16, #tpu.memory_space<vmem>>, vector<16x256xbf16>
    %cst_187 = arith.constant 0.000000e+00 : f32
    %269 = arith.truncf %cst_187 : f32 to bf16
    %270 = vector.shape_cast %24 : vector<1x256xi1> to vector<1x256xi1>
    %271 = vector.broadcast %270 : vector<1x256xi1> to vector<16x256xi1>
    %272 = vector.broadcast %269 : bf16 to vector<16x256xbf16>
    %273 = arith.select %271, %268, %272 : vector<16x256xi1>, vector<16x256xbf16>
    %c96_188 = arith.constant 96 : index
    %c256_189 = arith.constant 256 : index
    %274 = vector.load %arg10[%c96_188, %c256_189] : memref<144x512xbf16, #tpu.memory_space<vmem>>, vector<16x256xbf16>
    tpu.vector_store %arg10[%c96_188, %c256_189], %273 {strides = array<i32>} : memref<144x512xbf16, #tpu.memory_space<vmem>>, vector<16x256xbf16>,
    %c0_190 = arith.constant 0 : index
    %c144_191 = arith.constant 144 : index
    %275 = vector.load %arg9[%c0_190, %c144_191] : memref<16x512xbf16, #tpu.memory_space<vmem>>, vector<16x256xbf16>
    %c112_192 = arith.constant 112 : index
    %c256_193 = arith.constant 256 : index
    %276 = vector.load %arg10[%c112_192, %c256_193] : memref<144x512xbf16, #tpu.memory_space<vmem>>, vector<16x256xbf16>
    tpu.vector_store %arg10[%c112_192, %c256_193], %275 {strides = array<i32>} : memref<144x512xbf16, #tpu.memory_space<vmem>>, vector<16x256xbf16>,
    %c0_194 = arith.constant 0 : index
    %c145_195 = arith.constant 145 : index
    %277 = vector.load %arg9[%c0_194, %c145_195] : memref<16x512xbf16, #tpu.memory_space<vmem>>, vector<16x256xbf16>
    %cst_196 = arith.constant 0.000000e+00 : f32
    %278 = arith.truncf %cst_196 : f32 to bf16
    %279 = vector.shape_cast %26 : vector<1x256xi1> to vector<1x256xi1>
    %280 = vector.broadcast %279 : vector<1x256xi1> to vector<16x256xi1>
    %281 = vector.broadcast %278 : bf16 to vector<16x256xbf16>
    %282 = arith.select %280, %277, %281 : vector<16x256xi1>, vector<16x256xbf16>
    %c128_197 = arith.constant 128 : index
    %c256_198 = arith.constant 256 : index
    %283 = vector.load %arg10[%c128_197, %c256_198] : memref<144x512xbf16, #tpu.memory_space<vmem>>, vector<16x256xbf16>
    tpu.vector_store %arg10[%c128_197, %c256_198], %282 {strides = array<i32>} : memref<144x512xbf16, #tpu.memory_space<vmem>>, vector<16x256xbf16>,
    %c0_199 = arith.constant 0 : index
    %c0_200 = arith.constant 0 : index
    %284 = vector.load %arg5[%c0_199, %c0_200] : memref<16x144xbf16, #tpu.memory_space<vmem>>, vector<16x144xbf16>
    %c0_201 = arith.constant 0 : index
    %c0_202 = arith.constant 0 : index
    %285 = vector.load %arg10[%c0_201, %c0_202] : memref<144x512xbf16, #tpu.memory_space<vmem>>, vector<144x512xbf16>
    %cst_203 = arith.constant dense<0.000000e+00> : vector<16x512xf32>
    %286 = tpu.matmul %284, %285, %cst_203 {dimension_numbers = #tpu.dot_dimension_numbers<[1], [0], [0], [1], [0, 0, 1, 1], [], []>} : vector<16x144xbf16>, vector<144x512xbf16>, vector<16x512xf32> -> vector<16x512xf32>
    %287 = vector.extract_strided_slice %286 {offsets = [0, 0], sizes = [16, 256], strides = [1, 1]} : vector<16x512xf32> to vector<16x256xf32>
    %c0_204 = arith.constant 0 : index
    %c0_205 = arith.constant 0 : index
    %288 = vector.load %arg6[%c0_204, %c0_205] : memref<16x1xf32, #tpu.memory_space<vmem>>, vector<16x1xf32>
    %c0_206 = arith.constant 0 : index
    %c0_207 = arith.constant 0 : index
    %289 = vector.load %arg7[%c0_206, %c0_207] : memref<16x1xf32, #tpu.memory_space<vmem>>, vector<16x1xf32>
    %cst_208 = arith.constant dense<0.000000e+00> : vector<16xf32>
    %290 = vector.multi_reduction <add>, %287, %cst_208 [1] : vector<16x256xf32> to vector<16xf32>
    %291 = vector.shape_cast %290 : vector<16xf32> to vector<16x1xf32>
    %cst_209 = arith.constant 2.560000e+02 : f32
    %292 = vector.broadcast %cst_209 : f32 to vector<16x1xf32>
    %293 = arith.divf %291, %292 : vector<16x1xf32>
    %294 = vector.broadcast %293 : vector<16x1xf32> to vector<16x256xf32>
    %295 = arith.subf %287, %294 : vector<16x256xf32>
    %296 = arith.mulf %295, %295 : vector<16x256xf32>
    %cst_210 = arith.constant dense<0.000000e+00> : vector<16xf32>
    %297 = vector.multi_reduction <add>, %296, %cst_210 [1] : vector<16x256xf32> to vector<16xf32>
    %298 = vector.shape_cast %297 : vector<16xf32> to vector<16x1xf32>
    %cst_211 = arith.constant 2.560000e+02 : f32
    %299 = vector.broadcast %cst_211 : f32 to vector<16x1xf32>
    %300 = arith.divf %298, %299 : vector<16x1xf32>
    %cst_212 = arith.constant 9.99999974E-6 : f32
    %301 = vector.broadcast %cst_212 : f32 to vector<16x1xf32>
    %302 = arith.addf %300, %301 : vector<16x1xf32>
    %303 = math.rsqrt %302 : vector<16x1xf32>
    %304 = vector.broadcast %303 : vector<16x1xf32> to vector<16x256xf32>
    %305 = arith.mulf %295, %304 : vector<16x256xf32>
    %306 = vector.broadcast %288 : vector<16x1xf32> to vector<16x256xf32>
    %307 = arith.mulf %305, %306 : vector<16x256xf32>
    %308 = vector.broadcast %289 : vector<16x1xf32> to vector<16x256xf32>
    %309 = arith.addf %307, %308 : vector<16x256xf32>
    %cst_213 = arith.constant 0.000000e+00 : f32
    %310 = vector.broadcast %cst_213 : f32 to vector<16x256xf32>
    %311 = arith.maximumf %309, %310 : vector<16x256xf32>
    %312 = vector.extract_strided_slice %311 {offsets = [0, 0], sizes = [8, 256], strides = [1, 1]} : vector<16x256xf32> to vector<8x256xf32>
    %c0_214 = arith.constant 0 : index
    %c0_215 = arith.constant 0 : index
    %c0_216 = arith.constant 0 : index
    %313 = vector.load %arg8[%c0_214, %c0_215, %c0_216] : memref<2x8x256xf32, #tpu.memory_space<vmem>>, vector<1x8x256xf32>
    %314 = vector.shape_cast %313 : vector<1x8x256xf32> to vector<8x256xf32>
    %315 = vector.shape_cast %312 : vector<8x256xf32> to vector<1x8x256xf32>
    tpu.vector_store %arg8[%c0_214, %c0_215, %c0_216], %315 {strides = array<i32>} : memref<2x8x256xf32, #tpu.memory_space<vmem>>, vector<1x8x256xf32>,
    %316 = vector.extract_strided_slice %286 {offsets = [0, 256], sizes = [16, 256], strides = [1, 1]} : vector<16x512xf32> to vector<16x256xf32>
    %c0_217 = arith.constant 0 : index
    %c0_218 = arith.constant 0 : index
    %317 = vector.load %arg6[%c0_217, %c0_218] : memref<16x1xf32, #tpu.memory_space<vmem>>, vector<16x1xf32>
    %c0_219 = arith.constant 0 : index
    %c0_220 = arith.constant 0 : index
    %318 = vector.load %arg7[%c0_219, %c0_220] : memref<16x1xf32, #tpu.memory_space<vmem>>, vector<16x1xf32>
    %cst_221 = arith.constant dense<0.000000e+00> : vector<16xf32>
    %319 = vector.multi_reduction <add>, %316, %cst_221 [1] : vector<16x256xf32> to vector<16xf32>
    %320 = vector.shape_cast %319 : vector<16xf32> to vector<16x1xf32>
    %cst_222 = arith.constant 2.560000e+02 : f32
    %321 = vector.broadcast %cst_222 : f32 to vector<16x1xf32>
    %322 = arith.divf %320, %321 : vector<16x1xf32>
    %323 = vector.broadcast %322 : vector<16x1xf32> to vector<16x256xf32>
    %324 = arith.subf %316, %323 : vector<16x256xf32>
    %325 = arith.mulf %324, %324 : vector<16x256xf32>
    %cst_223 = arith.constant dense<0.000000e+00> : vector<16xf32>
    %326 = vector.multi_reduction <add>, %325, %cst_223 [1] : vector<16x256xf32> to vector<16xf32>
    %327 = vector.shape_cast %326 : vector<16xf32> to vector<16x1xf32>
    %cst_224 = arith.constant 2.560000e+02 : f32
    %328 = vector.broadcast %cst_224 : f32 to vector<16x1xf32>
    %329 = arith.divf %327, %328 : vector<16x1xf32>
    %cst_225 = arith.constant 9.99999974E-6 : f32
    %330 = vector.broadcast %cst_225 : f32 to vector<16x1xf32>
    %331 = arith.addf %329, %330 : vector<16x1xf32>
    %332 = math.rsqrt %331 : vector<16x1xf32>
    %333 = vector.broadcast %332 : vector<16x1xf32> to vector<16x256xf32>
    %334 = arith.mulf %324, %333 : vector<16x256xf32>
    %335 = vector.broadcast %317 : vector<16x1xf32> to vector<16x256xf32>
    %336 = arith.mulf %334, %335 : vector<16x256xf32>
    %337 = vector.broadcast %318 : vector<16x1xf32> to vector<16x256xf32>
    %338 = arith.addf %336, %337 : vector<16x256xf32>
    %cst_226 = arith.constant 0.000000e+00 : f32
    %339 = vector.broadcast %cst_226 : f32 to vector<16x256xf32>
    %340 = arith.maximumf %338, %339 : vector<16x256xf32>
    %341 = vector.extract_strided_slice %340 {offsets = [0, 0], sizes = [8, 256], strides = [1, 1]} : vector<16x256xf32> to vector<8x256xf32>
    %c1_227 = arith.constant 1 : index
    %c0_228 = arith.constant 0 : index
    %c0_229 = arith.constant 0 : index
    %342 = vector.load %arg8[%c1_227, %c0_228, %c0_229] : memref<2x8x256xf32, #tpu.memory_space<vmem>>, vector<1x8x256xf32>
    %343 = vector.shape_cast %342 : vector<1x8x256xf32> to vector<8x256xf32>
    %344 = vector.shape_cast %341 : vector<8x256xf32> to vector<1x8x256xf32>
    tpu.vector_store %arg8[%c1_227, %c0_228, %c0_229], %344 {strides = array<i32>} : memref<2x8x256xf32, #tpu.memory_space<vmem>>, vector<1x8x256xf32>,
    return
  }
  func.func @transform_0(%arg0: i32) -> (i32, i32, i32) {
    %c0_i32 = arith.constant 0 : i32
    %c0_i32_0 = arith.constant 0 : i32
    %c0_i32_1 = arith.constant 0 : i32
    return %arg0, %c0_i32, %c0_i32_0 : i32, i32, i32
  }
  func.func @transform_1(%arg0: i32) -> (i32, i32) {
    %c0_i32 = arith.constant 0 : i32
    %c0_i32_0 = arith.constant 0 : i32
    %c0_i32_1 = arith.constant 0 : i32
    return %c0_i32, %c0_i32_0 : i32, i32
  }
  func.func @transform_2(%arg0: i32) -> (i32, i32) {
    %c0_i32 = arith.constant 0 : i32
    %c0_i32_0 = arith.constant 0 : i32
    %c0_i32_1 = arith.constant 0 : i32
    return %c0_i32, %c0_i32_0 : i32, i32
  }
  func.func @transform_3(%arg0: i32) -> (i32, i32) {
    %c0_i32 = arith.constant 0 : i32
    %c0_i32_0 = arith.constant 0 : i32
    %c0_i32_1 = arith.constant 0 : i32
    return %c0_i32, %c0_i32_0 : i32, i32
  }
  func.func @transform_4(%arg0: i32) -> (i32, i32) {
    %c0_i32 = arith.constant 0 : i32
    %c0_i32_0 = arith.constant 0 : i32
    %c0_i32_1 = arith.constant 0 : i32
    return %c0_i32, %c0_i32_0 : i32, i32
  }
  func.func @transform_5(%arg0: i32) -> (i32, i32) {
    %c0_i32 = arith.constant 0 : i32
    %c0_i32_0 = arith.constant 0 : i32
    %c0_i32_1 = arith.constant 0 : i32
    return %c0_i32, %c0_i32_0 : i32, i32
  }
  func.func @transform_6(%arg0: i32) -> (i32, i32) {
    %c0_i32 = arith.constant 0 : i32
    %c0_i32_0 = arith.constant 0 : i32
    %c0_i32_1 = arith.constant 0 : i32
    return %c0_i32, %c0_i32_0 : i32, i32
  }
  func.func @transform_7(%arg0: i32) -> (i32, i32, i32) {
    %c0_i32 = arith.constant 0 : i32
    %c0_i32_0 = arith.constant 0 : i32
    %c0_i32_1 = arith.constant 0 : i32
    return %arg0, %c0_i32, %c0_i32_0 : i32, i32, i32
  }
}

</mosaic_0001>

<llo_original>
// kernel: tpu_custom_call.1
$region0: #{tpu_custom_call.1}
  #allocation0 [shape = 'u32[]', space=smem, size = 0x4, offset = 0x4, fixed_abs, tag = 'smem constant byte address 0x4 - core index']
  #allocation1 [shape = 'u32[144,128]{1,0:T(1,128)}', space=vmem, size = 0x12000, scoped, tag = 'internal scratch']
  #allocation2 [shape = 'bf16[16,512]{1,0:T(16,128)(2,1)}', space=vmem, size = 0x4000, scoped, tag = 'scratch operand']
  #allocation3 [shape = 'bf16[144,512]{1,0:T(16,128)(2,1)}', space=vmem, size = 0x24000, scoped, tag = 'scratch operand']
  %s0 = inlined_call_operand.vmem [shape: f32[4,4,256], index: 0, kind: input, shape index: {}]
  %s1 = inlined_call_operand.vmem [shape: bf16[16,144], index: 1, kind: input, shape index: {}]
  %s2 = inlined_call_operand.vmem [shape: f32[16,1], index: 2, kind: input, shape index: {}]
  %s3 = inlined_call_operand.vmem [shape: f32[16,1], index: 3, kind: input, shape index: {}]
  %s4 = inlined_call_operand.vmem [shape: bf16[16,144], index: 4, kind: input, shape index: {}]
  %s5 = inlined_call_operand.vmem [shape: f32[16,1], index: 5, kind: input, shape index: {}]
  %s6 = inlined_call_operand.vmem [shape: f32[16,1], index: 6, kind: input, shape index: {}]
  %s7 = inlined_call_operand.hbm [shape: f32[4,8,256], index: 7, kind: output, shape index: {}]
  %s8 = sld [smem:[#allocation0]]
  $region61: #{tpu_custom_call.1} parent=0
    _
  %s10 = ssub.s32 1, %s8
  %s11 = scalar_select 0, %s10, %s8
  $region1: #{tpu_custom_call.1} parent=0
    #allocation4 [shape = 'u8[32768]{0}', space=vmem, size = 0x8000, scoped, tag = 'output window, operand 0']
    #allocation5 [shape = 's32[2]{0}', space=sflag, size = 0x8, scoped, tag = 'scoped memory for tpu_custom_call.1']
    %12 = vsyncpa [#allocation5], 0
    %s13 = scalar_lea.sflag [#allocation5], 1
    %14 = vsyncpa %s13, 0
    loop: start=0, step=1, limit=4
    $region2: #{tpu_custom_call.1} parent=1 // loop_pre_header
      _
    $region3: #{tpu_custom_call.1} parent=1 // loop_header
      %s16 = sphi 0, %s20
      %p17 = scmp.ge.s32.totalorder %s16, 4
      %s26 = sphi 0, %s28
      %s29 = sphi 0, %s26
      %s30 = sphi 0, %s29
      %s46 = sphi 0, %s30
      %s50 = sphi 0, %s50
      %s52 = sphi 0, %s50
      %s53 = sphi 0, %s52
      %s67 = sphi 0, %s53
      %s71 = sphi 0, %s71
      %s73 = sphi 0, %s71
      %s74 = sphi 0, %s73
      %s88 = sphi 0, %s74
      %s92 = sphi 0, %s92
      %s94 = sphi 0, %s92
      %s95 = sphi 0, %s94
      %s109 = sphi 0, %s95
      %s113 = sphi 0, %s113
      %s115 = sphi 0, %s113
      %s116 = sphi 0, %s115
      %s130 = sphi 0, %s116
      %s134 = sphi 0, %s134
      %s136 = sphi 0, %s134
      %s137 = sphi 0, %s136
      %s151 = sphi 0, %s137
      %s155 = sphi 0, %s155
      %s157 = sphi 0, %s155
      %s158 = sphi 0, %s157
      %s172 = sphi 0, %s158
      %s178 = sphi 0, %s180
      %s181 = sphi 0, %s178
      %s182 = sphi 0, %s181
      %s198 = sphi 0, %s182
    $region4: #{tpu_custom_call.1} parent=1 // loop_header_branch
      %19 = sbr.rel (%p17) target = $region8
    $region5: #{tpu_custom_call.1} parent=1 // loop_body
      %s21 = ssub.s32 %s16, 1
      %s22 = ssub.s32 %s16, 2
      %s23 = sadd.s32 %s16, 1
      %s24 = ssub.s32 %s16, %s23
      %p25 = scmp.eq.s32.totalorder %s24, 0
      %s27 = sadd.s32 %s26, 1
      %s28 = scalar_select %p25, %s26, %s27
      %p31 = pneg %p25
      %p32 = scmp.eq.s32.totalorder %s16, 1
      %p33 = por %p31, %p32
      %p34 = scmp.ne.s32.totalorder %s26, %s29
      %p35 = scmp.eq.s32.totalorder %s16, 0
      %p36 = por %p34, %p35
      %p37 = scmp.ne.s32.totalorder %s26, %s29
      %p38 = scmp.eq.s32.totalorder %s21, 1
      %p39 = por %p37, %p38
      %p40 = scmp.ne.s32.totalorder %s29, %s30
      %p41 = scmp.eq.s32.totalorder %s21, 0
      %p42 = por %p40, %p41
      %p43 = scmp.ne.s32.totalorder %s29, %s30
      %p44 = scmp.eq.s32.totalorder %s22, 1
      %p45 = por %p43, %p44
      %p47 = scmp.ne.s32.totalorder %s30, %s46
      %p48 = scmp.eq.s32.totalorder %s22, 0
      %p49 = por %p47, %p48
      %s51 = sadd.s32 %s50, 1
      %p54 = scmp.eq.s32.totalorder %s16, 1
      %p55 = scmp.ne.s32.totalorder %s50, %s52
      %p56 = scmp.eq.s32.totalorder %s16, 0
      %p57 = por %p55, %p56
      %p58 = scmp.ne.s32.totalorder %s50, %s52
      %p59 = scmp.eq.s32.totalorder %s21, 1
      %p60 = por %p58, %p59
      %p61 = scmp.ne.s32.totalorder %s52, %s53
      %p62 = scmp.eq.s32.totalorder %s21, 0
      %p63 = por %p61, %p62
      %p64 = scmp.ne.s32.totalorder %s52, %s53
      %p65 = scmp.eq.s32.totalorder %s22, 1
      %p66 = por %p64, %p65
      %p68 = scmp.ne.s32.totalorder %s53, %s67
      %p69 = scmp.eq.s32.totalorder %s22, 0
      %p70 = por %p68, %p69
      %s72 = sadd.s32 %s71, 1
      %p75 = scmp.eq.s32.totalorder %s16, 1
      %p76 = scmp.ne.s32.totalorder %s71, %s73
      %p77 = scmp.eq.s32.totalorder %s16, 0
      %p78 = por %p76, %p77
      %p79 = scmp.ne.s32.totalorder %s71, %s73
      %p80 = scmp.eq.s32.totalorder %s21, 1
      %p81 = por %p79, %p80
      %p82 = scmp.ne.s32.totalorder %s73, %s74
      %p83 = scmp.eq.s32.totalorder %s21, 0
      %p84 = por %p82, %p83
      %p85 = scmp.ne.s32.totalorder %s73, %s74
      %p86 = scmp.eq.s32.totalorder %s22, 1
      %p87 = por %p85, %p86
      %p89 = scmp.ne.s32.totalorder %s74, %s88
      %p90 = scmp.eq.s32.totalorder %s22, 0
      %p91 = por %p89, %p90
      %s93 = sadd.s32 %s92, 1
      %p96 = scmp.eq.s32.totalorder %s16, 1
      %p97 = scmp.ne.s32.totalorder %s92, %s94
      %p98 = scmp.eq.s32.totalorder %s16, 0
      %p99 = por %p97, %p98
      %p100 = scmp.ne.s32.totalorder %s92, %s94
      %p101 = scmp.eq.s32.totalorder %s21, 1
      %p102 = por %p100, %p101
      %p103 = scmp.ne.s32.totalorder %s94, %s95
      %p104 = scmp.eq.s32.totalorder %s21, 0
      %p105 = por %p103, %p104
      %p106 = scmp.ne.s32.totalorder %s94, %s95
      %p107 = scmp.eq.s32.totalorder %s22, 1
      %p108 = por %p106, %p107
      %p110 = scmp.ne.s32.totalorder %s95, %s109
      %p111 = scmp.eq.s32.totalorder %s22, 0
      %p112 = por %p110, %p111
      %s114 = sadd.s32 %s113, 1
      %p117 = scmp.eq.s32.totalorder %s16, 1
      %p118 = scmp.ne.s32.totalorder %s113, %s115
      %p119 = scmp.eq.s32.totalorder %s16, 0
      %p120 = por %p118, %p119
      %p121 = scmp.ne.s32.totalorder %s113, %s115
      %p122 = scmp.eq.s32.totalorder %s21, 1
      %p123 = por %p121, %p122
      %p124 = scmp.ne.s32.totalorder %s115, %s116
      %p125 = scmp.eq.s32.totalorder %s21, 0
      %p126 = por %p124, %p125
      %p127 = scmp.ne.s32.totalorder %s115, %s116
      %p128 = scmp.eq.s32.totalorder %s22, 1
      %p129 = por %p127, %p128
      %p131 = scmp.ne.s32.totalorder %s116, %s130
      %p132 = scmp.eq.s32.totalorder %s22, 0
      %p133 = por %p131, %p132
      %s135 = sadd.s32 %s134, 1
      %p138 = scmp.eq.s32.totalorder %s16, 1
      %p139 = scmp.ne.s32.totalorder %s134, %s136
      %p140 = scmp.eq.s32.totalorder %s16, 0
      %p141 = por %p139, %p140
      %p142 = scmp.ne.s32.totalorder %s134, %s136
      %p143 = scmp.eq.s32.totalorder %s21, 1
      %p144 = por %p142, %p143
      %p145 = scmp.ne.s32.totalorder %s136, %s137
      %p146 = scmp.eq.s32.totalorder %s21, 0
      %p147 = por %p145, %p146
      %p148 = scmp.ne.s32.totalorder %s136, %s137
      %p149 = scmp.eq.s32.totalorder %s22, 1
      %p150 = por %p148, %p149
      %p152 = scmp.ne.s32.totalorder %s137, %s151
      %p153 = scmp.eq.s32.totalorder %s22, 0
      %p154 = por %p152, %p153
      %s156 = sadd.s32 %s155, 1
      %p159 = scmp.eq.s32.totalorder %s16, 1
      %p160 = scmp.ne.s32.totalorder %s155, %s157
      %p161 = scmp.eq.s32.totalorder %s16, 0
      %p162 = por %p160, %p161
      %p163 = scmp.ne.s32.totalorder %s155, %s157
      %p164 = scmp.eq.s32.totalorder %s21, 1
      %p165 = por %p163, %p164
      %p166 = scmp.ne.s32.totalorder %s157, %s158
      %p167 = scmp.eq.s32.totalorder %s21, 0
      %p168 = por %p166, %p167
      %p169 = scmp.ne.s32.totalorder %s157, %s158
      %p170 = scmp.eq.s32.totalorder %s22, 1
      %p171 = por %p169, %p170
      %p173 = scmp.ne.s32.totalorder %s158, %s172
      %p174 = scmp.eq.s32.totalorder %s22, 0
      %p175 = por %p173, %p174
      %s176 = ssub.s32 %s16, %s23
      %p177 = scmp.eq.s32.totalorder %s176, 0
      %s179 = sadd.s32 %s178, 1
      %s180 = scalar_select %p177, %s178, %s179
      %p183 = pneg %p177
      %p184 = scmp.eq.s32.totalorder %s16, 1
      %p185 = por %p183, %p184
      %p186 = scmp.ne.s32.totalorder %s178, %s181
      %p187 = scmp.eq.s32.totalorder %s16, 0
      %p188 = por %p186, %p187
      %p189 = scmp.ne.s32.totalorder %s178, %s181
      %p190 = scmp.eq.s32.totalorder %s21, 1
      %p191 = por %p189, %p190
      %p192 = scmp.ne.s32.totalorder %s181, %s182
      %p193 = scmp.eq.s32.totalorder %s21, 0
      %p194 = por %p192, %p193
      %p195 = scmp.ne.s32.totalorder %s181, %s182
      %p196 = scmp.eq.s32.totalorder %s22, 1
      %p197 = por %p195, %p196
      %p199 = scmp.ne.s32.totalorder %s182, %s198
      %p200 = scmp.eq.s32.totalorder %s22, 0
      %p201 = por %p199, %p200
      %p202 = scmp.le.s32.totalorder 1, %s16
      %p203 = scmp.lt.s32.totalorder %s16, 3
      %p204 = pnand %p202, %p203
      %p205 = pneg %p204
      // Predicated region
      $region9: #{tpu_custom_call.1} parent=5 // pred_check
        _
      $region10: #{tpu_custom_call.1} parent=5 // pred_check_branch
        %207 = sbr.rel (%p204) target = $region12
      $region11: #{tpu_custom_call.1} parent=5 // pred_region
        %s208 = ssub.s32 %s16, 1
        // Predicated region
        $region13: #{tpu_custom_call.1} parent=11 // pred_check
          %p209 = pneg %p63
        $region14: #{tpu_custom_call.1} parent=11 // pred_check_branch
          %211 = sbr.rel (%p209) target = $region16
        $region15: #{tpu_custom_call.1} parent=11 // pred_region
          _
        $region16: #{tpu_custom_call.1} parent=11 // pred_fallthru
          _
        // Predicated region
        $region17: #{tpu_custom_call.1} parent=11 // pred_check
          %p212 = pneg %p84
        $region18: #{tpu_custom_call.1} parent=11 // pred_check_branch
          %214 = sbr.rel (%p212) target = $region20
        $region19: #{tpu_custom_call.1} parent=11 // pred_region
          _
        $region20: #{tpu_custom_call.1} parent=11 // pred_fallthru
          _
        // Predicated region
        $region21: #{tpu_custom_call.1} parent=11 // pred_check
          %p215 = pneg %p105
        $region22: #{tpu_custom_call.1} parent=11 // pred_check_branch
          %217 = sbr.rel (%p215) target = $region24
        $region23: #{tpu_custom_call.1} parent=11 // pred_region
          _
        $region24: #{tpu_custom_call.1} parent=11 // pred_fallthru
          _
        // Predicated region
        $region25: #{tpu_custom_call.1} parent=11 // pred_check
          %p218 = pneg %p126
        $region26: #{tpu_custom_call.1} parent=11 // pred_check_branch
          %220 = sbr.rel (%p218) target = $region28
        $region27: #{tpu_custom_call.1} parent=11 // pred_region
          _
        $region28: #{tpu_custom_call.1} parent=11 // pred_fallthru
          _
        // Predicated region
        $region29: #{tpu_custom_call.1} parent=11 // pred_check
          %p221 = pneg %p147
        $region30: #{tpu_custom_call.1} parent=11 // pred_check_branch
          %223 = sbr.rel (%p221) target = $region32
        $region31: #{tpu_custom_call.1} parent=11 // pred_region
          _
        $region32: #{tpu_custom_call.1} parent=11 // pred_fallthru
          _
        // Predicated region
        $region33: #{tpu_custom_call.1} parent=11 // pred_check
          %p224 = pneg %p168
        $region34: #{tpu_custom_call.1} parent=11 // pred_check_branch
          %226 = sbr.rel (%p224) target = $region36
        $region35: #{tpu_custom_call.1} parent=11 // pred_region
          _
        $region36: #{tpu_custom_call.1} parent=11 // pred_fallthru
          _
      $region12: #{tpu_custom_call.1} parent=5 // pred_fallthru
        _
      %p227 = scmp.lt.s32.totalorder %s16, 2
      // Predicated region
      $region37: #{tpu_custom_call.1} parent=5 // pred_check
        %p228 = pneg %p227
      $region38: #{tpu_custom_call.1} parent=5 // pred_check_branch
        %230 = sbr.rel (%p228) target = $region40
      $region39: #{tpu_custom_call.1} parent=5 // pred_region
        // Predicated region
        $region41: #{tpu_custom_call.1} parent=39 // pred_check
          %p231 = pneg %p36
        $region42: #{tpu_custom_call.1} parent=39 // pred_check_branch
          %233 = sbr.rel (%p231) target = $region44
        $region43: #{tpu_custom_call.1} parent=39 // pred_region
          %s234 = smul.u32 2, %s16
          %p235 = scmp.lt.s32.totalorder %s234, 3
          %s236 = scalar_select %p235, %s234, 3
          %s237 = smul.addr %s236, 2
          %s238 = smul.addr %s237, 4
          %s239 = scalar_lea.vmem %s0, %s238
          %s240 = smul.u32 2, %s16
        $region44: #{tpu_custom_call.1} parent=39 // pred_fallthru
          _
      $region40: #{tpu_custom_call.1} parent=5 // pred_fallthru
        _
      %p241 = scmp.le.s32.totalorder 1, %s16
      %p242 = scmp.lt.s32.totalorder %s16, 3
      %p243 = pnand %p241, %p242
      %p244 = pneg %p243
      // Predicated region
      $region45: #{tpu_custom_call.1} parent=5 // pred_check
        _
      $region46: #{tpu_custom_call.1} parent=5 // pred_check_branch
        %246 = sbr.rel (%p243) target = $region48
      $region47: #{tpu_custom_call.1} parent=5 // pred_region
        %s247 = ssub.s32 %s16, 1
        %s248 = smul.u32 2, %s21
        %p249 = scmp.lt.s32.totalorder %s248, 3
        %s250 = scalar_select %p249, %s248, 3
        %s251 = smul.addr %s250, 2
        %s252 = smul.addr %s251, 4
        %s253 = scalar_lea.vmem %s0, %s252
        %p254 = pneg %p42
        %p255 = pneg %p39
        %p256 = pneg %p63
        %p257 = pneg %p60
        %p258 = pneg %p84
        %p259 = pneg %p81
        %p260 = pneg %p105
        %p261 = pneg %p102
        %p262 = pneg %p126
        %p263 = pneg %p123
        %p264 = pneg %p147
        %p265 = pneg %p144
        %p266 = pneg %p168
        %p267 = pneg %p165
        %p268 = pneg %p194
        %p269 = pneg %p191
        %s270 = sand.u32 %s181, 1
        %s271 = scalar_lea.sflag [#allocation5], %s270
        %s272 = sand.u32 %s181, 1
        %s273 = smul.addr %s272, 32
        %s274 = scalar_lea.vmem [#allocation4], %s273
        %s275 = smul.u32 2, %s21
        %p276 = scmp.lt.s32.totalorder %s275, 3
        %s277 = scalar_select %p276, %s275, 3
        %s278 = smul.addr %s277, 2
        %s279 = smul.addr %s278, 4
        %s280 = scalar_lea.vmem %s0, %s279
        %s281 = smul.u32 2, %s21
        %s282 = smul.u32 2, %s21
        %286 = vst [vmem:[#allocation2] sm:$0xff] 0
        %287 = vst [vmem:[#allocation2 + $0x18] sm:$0xff] 0
        %288 = vst [vmem:[#allocation2] sm:$0xfc] 0
        %289 = vst [vmem:[#allocation2 + $0x8] sm:$0xfc] 0
        %290 = vst [vmem:[#allocation2 + $0x10] sm:$0xfc] 0
        %291 = vst [vmem:[#allocation2 + $0x18] sm:$0xfc] 0
        %v292 = vlaneseq
        %v293 = vand.u32 %v292, 127
        %v294 = vadd.s32 %v293, 128
        %vm295 = vcmp.lt.s32.totalorder %v293, 0
        %v296 = vsub.s32 0, %v293
        %v297 = vsel %vm295, %v296, %v293
        %v298 = vshrl.u32 %v297, 4
        %v299 = vand.u32 %v297, 15
        %v300 = vsub.s32 0, %v299
        %v301 = vsel %vm295, %v300, %v299
        %vm302 = vcmp.lt.s32.totalorder %v294, 0
        %v303 = vsub.s32 0, %v294
        %v304 = vsel %vm302, %v303, %v294
        %v305 = vshrl.u32 %v304, 4
        %v306 = vand.u32 %v304, 15
        %v307 = vsub.s32 0, %v306
        %v308 = vsel %vm302, %v307, %v306
        %vm309 = vcmp.ne.s32.totalorder %v301, 0
        %vm310 = vcmp.ne.s32.totalorder %v308, 0
        %vm311 = vcmp.lt.s32.totalorder %v301, 0
        %vm312 = vcmp.lt.s32.totalorder %v308, 0
        %vm313 = vmand %vm311, %vm309
        %vm314 = vmand %vm312, %vm310
        %v315 = vadd.s32 %v301, 16
        %v316 = vadd.s32 %v308, 16
        %v317 = vsel %vm313, %v315, %v301
        %v318 = vsel %vm314, %v316, %v308
        %vm319 = vcmp.ge.s32.totalorder %v317, 1
        %vm320 = vcmp.ge.s32.totalorder %v318, 1
        %vm321 = vcmp.le.s32.totalorder %v317, 14
        %vm322 = vcmp.le.s32.totalorder %v318, 14
        %v323 = vld [vmem:[%s280] sm:$0xff]
        %v325 = vcombine.high %v323, %v323
        %v327 = vpack.c.bf16 %v323, %v323
        %v328 = vpack.c.bf16 %v325, %v325
        %329 = vst [vmem:[#allocation2 + $0x8] sm:$0x3] %v327
        %330 = vst [vmem:[#allocation2 + $0x10] sm:$0x3] %v328
        %v331 = vld [vmem:[#allocation2] sm:$0xff]
        %v332 = vld [vmem:[#allocation2 + $0x8] sm:$0xff]
        %v333 = vld [vmem:[#allocation2 + $0x10] sm:$0xff]
        %v334 = vsel %vm319, 1, 0
        %v335 = vsel %vm320, 1, 0
        %vm336 = vcmp.eq.s32.totalorder %v334, 1
        %vm337 = vcmp.eq.s32.totalorder %v335, 1
        %vm338 = vmpackc.low %vm337, %vm336
        %v339 = vsel %vm338, 65537, 0
        %v340 = vlaneseq
        %v341 = vshrl.u32 %v340, 7
        %v342 = vsub.s32 0, %v341
        %v343 = vrot.slane %v339, %v342
        %v344 = vlaneseq
        %v345 = vshrl.u32 %v344, 7
        %v346 = vsub.s32 4, %v345
        %v347 = vrot.slane %v339, %v346
        %348 = vrot.lane.b32.xlu0 %v343, 111
        %v349 = vpop.permute.xlu0 %348
        %350 = vrot.lane.b32.xlu0 %v347, 111
        %v351 = vpop.permute.xlu0 %350
        %vm352 = vcmask 908288
        %v353 = vsel %vm352, %v349, %v351
        %vm354 = vcmp.ne.s16.totalorder %v349, 0
        %vm355 = vcmp.ne.s16.totalorder %v353, 0
        %vm356 = vcmp.ne.s16.totalorder %v351, 0
        %v357 = vsel %vm354, %v331, 0
        %v358 = vsel %vm355, %v332, 0
        %v359 = vsel %vm356, %v333, 0
        %363 = vrot.lane.b32.xlu0 %v357, 17
        %v364 = vpop.permute.xlu0 %363
        %365 = vrot.lane.b32.xlu0 %v358, 17
        %v366 = vpop.permute.xlu0 %365
        %367 = vrot.lane.b32.xlu0 %v359, 17
        %v368 = vpop.permute.xlu0 %367
        %vm369 = vcmask 138240
        %v370 = vsel %vm369, %v364, %v366
        %v371 = vsel %vm369, %v366, %v368
        %374 = vst [vmem:[#allocation3] sm:$0xff] %v370
        %375 = vst [vmem:[#allocation3 + $0x8] sm:$0xff] %v371
        %v376 = vld [vmem:[#allocation2] sm:$0xff]
        %v377 = vld [vmem:[#allocation2 + $0x8] sm:$0xff]
        %v378 = vld [vmem:[#allocation2 + $0x10] sm:$0xff]
        %382 = vrot.lane.b32.xlu0 %v376, 16
        %v383 = vpop.permute.xlu0 %382
        %384 = vrot.lane.b32.xlu0 %v377, 16
        %v385 = vpop.permute.xlu0 %384
        %386 = vrot.lane.b32.xlu0 %v378, 16
        %v387 = vpop.permute.xlu0 %386
        %vm388 = vcmask 130048
        %v389 = vsel %vm388, %v383, %v385
        %v390 = vsel %vm388, %v385, %v387
        %393 = vst [vmem:[#allocation3 + $0x20] sm:$0xff] %v389
        %394 = vst [vmem:[#allocation3 + $0x28] sm:$0xff] %v390
        %v395 = vld [vmem:[#allocation2] sm:$0xff]
        %v396 = vld [vmem:[#allocation2 + $0x8] sm:$0xff]
        %v397 = vld [vmem:[#allocation2 + $0x10] sm:$0xff]
        %v398 = vsel %vm321, 1, 0
        %v399 = vsel %vm322, 1, 0
        %vm400 = vcmp.eq.s32.totalorder %v398, 1
        %vm401 = vcmp.eq.s32.totalorder %v399, 1
        %vm402 = vmpackc.low %vm401, %vm400
        %v403 = vsel %vm402, 65537, 0
        %v404 = vlaneseq
        %v405 = vshrl.u32 %v404, 7
        %v406 = vsub.s32 0, %v405
        %v407 = vrot.slane %v403, %v406
        %v408 = vlaneseq
        %v409 = vshrl.u32 %v408, 7
        %v410 = vsub.s32 4, %v409
        %v411 = vrot.slane %v403, %v410
        %412 = vrot.lane.b32.xlu0 %v407, 113
        %v413 = vpop.permute.xlu0 %412
        %414 = vrot.lane.b32.xlu0 %v411, 113
        %v415 = vpop.permute.xlu0 %414
        %vm416 = vcmask 924672
        %v417 = vsel %vm416, %v413, %v415
        %vm418 = vcmp.ne.s16.totalorder %v413, 0
        %vm419 = vcmp.ne.s16.totalorder %v417, 0
        %vm420 = vcmp.ne.s16.totalorder %v415, 0
        %v421 = vsel %vm418, %v395, 0
        %v422 = vsel %vm419, %v396, 0
        %v423 = vsel %vm420, %v397, 0
        %427 = vrot.lane.b32.xlu0 %v421, 15
        %v428 = vpop.permute.xlu0 %427
        %429 = vrot.lane.b32.xlu0 %v422, 15
        %v430 = vpop.permute.xlu0 %429
        %431 = vrot.lane.b32.xlu0 %v423, 15
        %v432 = vpop.permute.xlu0 %431
        %vm433 = vcmask 121856
        %v434 = vsel %vm433, %v428, %v430
        %v435 = vsel %vm433, %v430, %v432
        %438 = vst [vmem:[#allocation3 + $0x40] sm:$0xff] %v434
        %439 = vst [vmem:[#allocation3 + $0x48] sm:$0xff] %v435
        %v440 = vld [vmem:[#allocation2] sm:$0xff]
        %v441 = vld [vmem:[#allocation2 + $0x8] sm:$0xff]
        %v442 = vld [vmem:[#allocation2 + $0x10] sm:$0xff]
        %443 = vrot.lane.b32.xlu0 %v343, 127
        %v444 = vpop.permute.xlu0 %443
        %445 = vrot.lane.b32.xlu0 %v347, 127
        %v446 = vpop.permute.xlu0 %445
        %vm447 = vcmask 1039360
        %v448 = vsel %vm447, %v444, %v446
        %vm449 = vcmp.ne.s16.totalorder %v444, 0
        %vm450 = vcmp.ne.s16.totalorder %v448, 0
        %vm451 = vcmp.ne.s16.totalorder %v446, 0
        %v452 = vsel %vm449, %v440, 0
        %v453 = vsel %vm450, %v441, 0
        %v454 = vsel %vm451, %v442, 0
        %458 = vrot.lane.b32.xlu0 %v452, 1
        %v459 = vpop.permute.xlu0 %458
        %460 = vrot.lane.b32.xlu0 %v453, 1
        %v461 = vpop.permute.xlu0 %460
        %462 = vrot.lane.b32.xlu0 %v454, 1
        %v463 = vpop.permute.xlu0 %462
        %vm464 = vcmask 7168
        %v465 = vsel %vm464, %v459, %v461
        %v466 = vsel %vm464, %v461, %v463
        %469 = vst [vmem:[#allocation3 + $0x60] sm:$0xff] %v465
        %470 = vst [vmem:[#allocation3 + $0x68] sm:$0xff] %v466
        %v471 = vld [vmem:[#allocation2 + $0x8] sm:$0xff]
        %v472 = vld [vmem:[#allocation2 + $0x10] sm:$0xff]
        %473 = vst [vmem:[#allocation3 + $0x80] sm:$0xff] %v471
        %474 = vst [vmem:[#allocation3 + $0x88] sm:$0xff] %v472
        %v475 = vld [vmem:[#allocation2 + $0x8] sm:$0xff]
        %v476 = vld [vmem:[#allocation2 + $0x10] sm:$0xff]
        %v477 = vld [vmem:[#allocation2 + $0x18] sm:$0xff]
        %478 = vrot.lane.b32.xlu0 %v407, 1
        %v479 = vpop.permute.xlu0 %478
        %480 = vrot.lane.b32.xlu0 %v411, 1
        %v481 = vpop.permute.xlu0 %480
        %v482 = vsel %vm464, %v479, %v481
        %vm483 = vcmp.ne.s16.totalorder %v479, 0
        %vm484 = vcmp.ne.s16.totalorder %v482, 0
        %vm485 = vcmp.ne.s16.totalorder %v481, 0
        %v486 = vsel %vm483, %v475, 0
        %v487 = vsel %vm484, %v476, 0
        %v488 = vsel %vm485, %v477, 0
        %492 = vrot.lane.b32.xlu0 %v486, 127
        %v493 = vpop.permute.xlu0 %492
        %494 = vrot.lane.b32.xlu0 %v487, 127
        %v495 = vpop.permute.xlu0 %494
        %496 = vrot.lane.b32.xlu0 %v488, 127
        %v497 = vpop.permute.xlu0 %496
        %v498 = vsel %vm447, %v493, %v495
        %v499 = vsel %vm447, %v495, %v497
        %502 = vst [vmem:[#allocation3 + $0xa0] sm:$0xff] %v498
        %503 = vst [vmem:[#allocation3 + $0xa8] sm:$0xff] %v499
        %v504 = vld [vmem:[#allocation2 + $0x8] sm:$0xff]
        %v505 = vld [vmem:[#allocation2 + $0x10] sm:$0xff]
        %v506 = vld [vmem:[#allocation2 + $0x18] sm:$0xff]
        %507 = vrot.lane.b32.xlu0 %v343, 15
        %v508 = vpop.permute.xlu0 %507
        %509 = vrot.lane.b32.xlu0 %v347, 15
        %v510 = vpop.permute.xlu0 %509
        %v511 = vsel %vm433, %v508, %v510
        %vm512 = vcmp.ne.s16.totalorder %v508, 0
        %vm513 = vcmp.ne.s16.totalorder %v511, 0
        %vm514 = vcmp.ne.s16.totalorder %v510, 0
        %v515 = vsel %vm512, %v504, 0
        %v516 = vsel %vm513, %v505, 0
        %v517 = vsel %vm514, %v506, 0
        %521 = vrot.lane.b32.xlu0 %v515, 113
        %v522 = vpop.permute.xlu0 %521
        %523 = vrot.lane.b32.xlu0 %v516, 113
        %v524 = vpop.permute.xlu0 %523
        %525 = vrot.lane.b32.xlu0 %v517, 113
        %v526 = vpop.permute.xlu0 %525
        %v527 = vsel %vm416, %v522, %v524
        %v528 = vsel %vm416, %v524, %v526
        %531 = vst [vmem:[#allocation3 + $0xc0] sm:$0xff] %v527
        %532 = vst [vmem:[#allocation3 + $0xc8] sm:$0xff] %v528
        %v533 = vld [vmem:[#allocation2 + $0x8] sm:$0xff]
        %v534 = vld [vmem:[#allocation2 + $0x10] sm:$0xff]
        %v535 = vld [vmem:[#allocation2 + $0x18] sm:$0xff]
        %539 = vrot.lane.b32.xlu0 %v533, 112
        %v540 = vpop.permute.xlu0 %539
        %541 = vrot.lane.b32.xlu0 %v534, 112
        %v542 = vpop.permute.xlu0 %541
        %543 = vrot.lane.b32.xlu0 %v535, 112
        %v544 = vpop.permute.xlu0 %543
        %vm545 = vcmask 916480
        %v546 = vsel %vm545, %v540, %v542
        %v547 = vsel %vm545, %v542, %v544
        %550 = vst [vmem:[#allocation3 + $0xe0] sm:$0xff] %v546
        %551 = vst [vmem:[#allocation3 + $0xe8] sm:$0xff] %v547
        %v552 = vld [vmem:[#allocation2 + $0x8] sm:$0xff]
        %v553 = vld [vmem:[#allocation2 + $0x10] sm:$0xff]
        %v554 = vld [vmem:[#allocation2 + $0x18] sm:$0xff]
        %555 = vrot.lane.b32.xlu0 %v407, 17
        %v556 = vpop.permute.xlu0 %555
        %557 = vrot.lane.b32.xlu0 %v411, 17
        %v558 = vpop.permute.xlu0 %557
        %v559 = vsel %vm369, %v556, %v558
        %vm560 = vcmp.ne.s16.totalorder %v556, 0
        %vm561 = vcmp.ne.s16.totalorder %v559, 0
        %vm562 = vcmp.ne.s16.totalorder %v558, 0
        %v563 = vsel %vm560, %v552, 0
        %v564 = vsel %vm561, %v553, 0
        %v565 = vsel %vm562, %v554, 0
        %569 = vrot.lane.b32.xlu0 %v563, 111
        %v570 = vpop.permute.xlu0 %569
        %571 = vrot.lane.b32.xlu0 %v564, 111
        %v572 = vpop.permute.xlu0 %571
        %573 = vrot.lane.b32.xlu0 %v565, 111
        %v574 = vpop.permute.xlu0 %573
        %v575 = vsel %vm352, %v570, %v572
        %v576 = vsel %vm352, %v572, %v574
        %579 = vst [vmem:[#allocation3 + $0x100] sm:$0xff] %v575
        %580 = vst [vmem:[#allocation3 + $0x108] sm:$0xff] %v576
        %s581 = scalar_lea.vmem %s280, 8
        %v582 = vld [vmem:[%s581] sm:$0xff]
        %v584 = vcombine.high %v582, %v582
        %v586 = vpack.c.bf16 %v582, %v582
        %v587 = vpack.c.bf16 %v584, %v584
        %588 = vst [vmem:[#allocation2 + $0x8] sm:$0x3] %v586
        %589 = vst [vmem:[#allocation2 + $0x10] sm:$0x3] %v587
        %v590 = vld [vmem:[#allocation2] sm:$0xff]
        %v591 = vld [vmem:[#allocation2 + $0x8] sm:$0xff]
        %v592 = vld [vmem:[#allocation2 + $0x10] sm:$0xff]
        %v593 = vsel %vm354, %v590, 0
        %v594 = vsel %vm355, %v591, 0
        %v595 = vsel %vm356, %v592, 0
        %599 = vrot.lane.b32.xlu0 %v593, 17
        %v600 = vpop.permute.xlu0 %599
        %601 = vrot.lane.b32.xlu0 %v594, 17
        %v602 = vpop.permute.xlu0 %601
        %603 = vrot.lane.b32.xlu0 %v595, 17
        %v604 = vpop.permute.xlu0 %603
        %v605 = vsel %vm369, %v600, %v602
        %v606 = vsel %vm369, %v602, %v604
        %609 = vst [vmem:[#allocation3 + $0x10] sm:$0xff] %v605
        %610 = vst [vmem:[#allocation3 + $0x18] sm:$0xff] %v606
        %v611 = vld [vmem:[#allocation2] sm:$0xff]
        %v612 = vld [vmem:[#allocation2 + $0x8] sm:$0xff]
        %v613 = vld [vmem:[#allocation2 + $0x10] sm:$0xff]
        %617 = vrot.lane.b32.xlu0 %v611, 16
        %v618 = vpop.permute.xlu0 %617
        %619 = vrot.lane.b32.xlu0 %v612, 16
        %v620 = vpop.permute.xlu0 %619
        %621 = vrot.lane.b32.xlu0 %v613, 16
        %v622 = vpop.permute.xlu0 %621
        %v623 = vsel %vm388, %v618, %v620
        %v624 = vsel %vm388, %v620, %v622
        %627 = vst [vmem:[#allocation3 + $0x30] sm:$0xff] %v623
        %628 = vst [vmem:[#allocation3 + $0x38] sm:$0xff] %v624
        %v629 = vld [vmem:[#allocation2] sm:$0xff]
        %v630 = vld [vmem:[#allocation2 + $0x8] sm:$0xff]
        %v631 = vld [vmem:[#allocation2 + $0x10] sm:$0xff]
        %v632 = vsel %vm418, %v629, 0
        %v633 = vsel %vm419, %v630, 0
        %v634 = vsel %vm420, %v631, 0
        %638 = vrot.lane.b32.xlu0 %v632, 15
        %v639 = vpop.permute.xlu0 %638
        %640 = vrot.lane.b32.xlu0 %v633, 15
        %v641 = vpop.permute.xlu0 %640
        %642 = vrot.lane.b32.xlu0 %v634, 15
        %v643 = vpop.permute.xlu0 %642
        %v644 = vsel %vm433, %v639, %v641
        %v645 = vsel %vm433, %v641, %v643
        %648 = vst [vmem:[#allocation3 + $0x50] sm:$0xff] %v644
        %649 = vst [vmem:[#allocation3 + $0x58] sm:$0xff] %v645
        %v650 = vld [vmem:[#allocation2] sm:$0xff]
        %v651 = vld [vmem:[#allocation2 + $0x8] sm:$0xff]
        %v652 = vld [vmem:[#allocation2 + $0x10] sm:$0xff]
        %v653 = vsel %vm449, %v650, 0
        %v654 = vsel %vm450, %v651, 0
        %v655 = vsel %vm451, %v652, 0
        %659 = vrot.lane.b32.xlu0 %v653, 1
        %v660 = vpop.permute.xlu0 %659
        %661 = vrot.lane.b32.xlu0 %v654, 1
        %v662 = vpop.permute.xlu0 %661
        %663 = vrot.lane.b32.xlu0 %v655, 1
        %v664 = vpop.permute.xlu0 %663
        %v665 = vsel %vm464, %v660, %v662
        %v666 = vsel %vm464, %v662, %v664
        %669 = vst [vmem:[#allocation3 + $0x70] sm:$0xff] %v665
        %670 = vst [vmem:[#allocation3 + $0x78] sm:$0xff] %v666
        %v671 = vld [vmem:[#allocation2 + $0x8] sm:$0xff]
        %v672 = vld [vmem:[#allocation2 + $0x10] sm:$0xff]
        %673 = vst [vmem:[#allocation3 + $0x90] sm:$0xff] %v671
        %674 = vst [vmem:[#allocation3 + $0x98] sm:$0xff] %v672
        %v675 = vld [vmem:[#allocation2 + $0x8] sm:$0xff]
        %v676 = vld [vmem:[#allocation2 + $0x10] sm:$0xff]
        %v677 = vld [vmem:[#allocation2 + $0x18] sm:$0xff]
        %v678 = vsel %vm483, %v675, 0
        %v679 = vsel %vm484, %v676, 0
        %v680 = vsel %vm485, %v677, 0
        %684 = vrot.lane.b32.xlu0 %v678, 127
        %v685 = vpop.permute.xlu0 %684
        %686 = vrot.lane.b32.xlu0 %v679, 127
        %v687 = vpop.permute.xlu0 %686
        %688 = vrot.lane.b32.xlu0 %v680, 127
        %v689 = vpop.permute.xlu0 %688
        %v690 = vsel %vm447, %v685, %v687
        %v691 = vsel %vm447, %v687, %v689
        %694 = vst [vmem:[#allocation3 + $0xb0] sm:$0xff] %v690
        %695 = vst [vmem:[#allocation3 + $0xb8] sm:$0xff] %v691
        %v696 = vld [vmem:[#allocation2 + $0x8] sm:$0xff]
        %v697 = vld [vmem:[#allocation2 + $0x10] sm:$0xff]
        %v698 = vld [vmem:[#allocation2 + $0x18] sm:$0xff]
        %v699 = vsel %vm512, %v696, 0
        %v700 = vsel %vm513, %v697, 0
        %v701 = vsel %vm514, %v698, 0
        %705 = vrot.lane.b32.xlu0 %v699, 113
        %v706 = vpop.permute.xlu0 %705
        %707 = vrot.lane.b32.xlu0 %v700, 113
        %v708 = vpop.permute.xlu0 %707
        %709 = vrot.lane.b32.xlu0 %v701, 113
        %v710 = vpop.permute.xlu0 %709
        %v711 = vsel %vm416, %v706, %v708
        %v712 = vsel %vm416, %v708, %v710
        %715 = vst [vmem:[#allocation3 + $0xd0] sm:$0xff] %v711
        %716 = vst [vmem:[#allocation3 + $0xd8] sm:$0xff] %v712
        %v717 = vld [vmem:[#allocation2 + $0x8] sm:$0xff]
        %v718 = vld [vmem:[#allocation2 + $0x10] sm:$0xff]
        %v719 = vld [vmem:[#allocation2 + $0x18] sm:$0xff]
        %723 = vrot.lane.b32.xlu0 %v717, 112
        %v724 = vpop.permute.xlu0 %723
        %725 = vrot.lane.b32.xlu0 %v718, 112
        %v726 = vpop.permute.xlu0 %725
        %727 = vrot.lane.b32.xlu0 %v719, 112
        %v728 = vpop.permute.xlu0 %727
        %v729 = vsel %vm545, %v724, %v726
        %v730 = vsel %vm545, %v726, %v728
        %733 = vst [vmem:[#allocation3 + $0xf0] sm:$0xff] %v729
        %734 = vst [vmem:[#allocation3 + $0xf8] sm:$0xff] %v730
        %v735 = vld [vmem:[#allocation2 + $0x8] sm:$0xff]
        %v736 = vld [vmem:[#allocation2 + $0x10] sm:$0xff]
        %v737 = vld [vmem:[#allocation2 + $0x18] sm:$0xff]
        %v738 = vsel %vm560, %v735, 0
        %v739 = vsel %vm561, %v736, 0
        %v740 = vsel %vm562, %v737, 0
        %744 = vrot.lane.b32.xlu0 %v738, 111
        %v745 = vpop.permute.xlu0 %744
        %746 = vrot.lane.b32.xlu0 %v739, 111
        %v747 = vpop.permute.xlu0 %746
        %748 = vrot.lane.b32.xlu0 %v740, 111
        %v749 = vpop.permute.xlu0 %748
        %v750 = vsel %vm352, %v745, %v747
        %v751 = vsel %vm352, %v747, %v749
        %754 = vst [vmem:[#allocation3 + $0x110] sm:$0xff] %v750
        %755 = vst [vmem:[#allocation3 + $0x118] sm:$0xff] %v751
        %v756 = vld [vmem:[%s1] sm:$0xff]
        %v757 = vld [vmem:[%s1 + $0x8] sm:$0xff]
        %v758 = vld [vmem:[#allocation3] sm:$0xff]
        %v759 = vld [vmem:[#allocation3 + $0x8] sm:$0xff]
        %v760 = vld [vmem:[#allocation3 + $0x10] sm:$0xff]
        %v761 = vld [vmem:[#allocation3 + $0x18] sm:$0xff]
        %v762 = vld [vmem:[#allocation3 + $0x20] sm:$0xff]
        %v763 = vld [vmem:[#allocation3 + $0x28] sm:$0xff]
        %v764 = vld [vmem:[#allocation3 + $0x30] sm:$0xff]
        %v765 = vld [vmem:[#allocation3 + $0x38] sm:$0xff]
        %v766 = vld [vmem:[#allocation3 + $0x40] sm:$0xff]
        %v767 = vld [vmem:[#allocation3 + $0x48] sm:$0xff]
        %v768 = vld [vmem:[#allocation3 + $0x50] sm:$0xff]
        %v769 = vld [vmem:[#allocation3 + $0x58] sm:$0xff]
        %v770 = vld [vmem:[#allocation3 + $0x60] sm:$0xff]
        %v771 = vld [vmem:[#allocation3 + $0x68] sm:$0xff]
        %v772 = vld [vmem:[#allocation3 + $0x70] sm:$0xff]
        %v773 = vld [vmem:[#allocation3 + $0x78] sm:$0xff]
        %v774 = vld [vmem:[#allocation3 + $0x80] sm:$0xff]
        %v775 = vld [vmem:[#allocation3 + $0x88] sm:$0xff]
        %v776 = vld [vmem:[#allocation3 + $0x90] sm:$0xff]
        %v777 = vld [vmem:[#allocation3 + $0x98] sm:$0xff]
        %v778 = vld [vmem:[#allocation3 + $0xa0] sm:$0xff]
        %v779 = vld [vmem:[#allocation3 + $0xa8] sm:$0xff]
        %v780 = vld [vmem:[#allocation3 + $0xb0] sm:$0xff]
        %v781 = vld [vmem:[#allocation3 + $0xb8] sm:$0xff]
        %v782 = vld [vmem:[#allocation3 + $0xc0] sm:$0xff]
        %v783 = vld [vmem:[#allocation3 + $0xc8] sm:$0xff]
        %v784 = vld [vmem:[#allocation3 + $0xd0] sm:$0xff]
        %v785 = vld [vmem:[#allocation3 + $0xd8] sm:$0xff]
        %v786 = vld [vmem:[#allocation3 + $0xe0] sm:$0xff]
        %v787 = vld [vmem:[#allocation3 + $0xe8] sm:$0xff]
        %v788 = vld [vmem:[#allocation3 + $0xf0] sm:$0xff]
        %v789 = vld [vmem:[#allocation3 + $0xf8] sm:$0xff]
        %v790 = vld [vmem:[#allocation3 + $0x100] sm:$0xff]
        %v791 = vld [vmem:[#allocation3 + $0x108] sm:$0xff]
        %v792 = vld [vmem:[#allocation3 + $0x110] sm:$0xff]
        %v793 = vld [vmem:[#allocation3 + $0x118] sm:$0xff]
        %v796 = vunpack.c.l.b16 %v756
        %v797 = vunpack.c.h.b16 %v756
        %v798 = vunpack.c.l.b16 %v757
        %v799 = vunpack.c.h.b16 %v757
        %v800 = vpack.c.b16 %v798, %v796
        %v801 = vpack.c.b16 %v799, %v797
        %vm803 = vcmask 130048
        %v805 = vsel %vm803, %v801, 0
        %807 = vmatprep.subr.bf16.mxu0 %v759
        %808 = vmatpush1.bf16.msra.mxu0 %v758
        %809 = vmatprep.subr.bf16.mxu0 %v763
        %810 = vmatpush1.bf16.msra.mxu0 %v762
        %811 = vmatprep.subr.bf16.mxu0 %v767
        %812 = vmatpush1.bf16.msra.mxu0 %v766
        %813 = vmatprep.subr.bf16.mxu0 %v771
        %814 = vmatpush1.bf16.msra.mxu0 %v770
        %815 = vmatprep.subr.bf16.mxu0 %v775
        %816 = vmatpush1.bf16.msra.mxu0 %v774
        %817 = vmatprep.subr.bf16.mxu0 %v779
        %818 = vmatpush1.bf16.msra.mxu0 %v778
        %819 = vmatprep.subr.bf16.mxu0 %v783
        %820 = vmatpush1.bf16.msra.mxu0 %v782
        %821 = vmatprep.subr.bf16.mxu0 %v787
        %822 = vmatpush1.bf16.msra.mxu0 %v786
        %823 = vmatprep.subr.bf16.mxu0 %v791
        %824 = vmatpush1.bf16.msra.mxu0 %v790
        %825 = vmatprep.subr.bf16.mxu0 0
        %826 = vmatpush1.bf16.msra.mxu0 0
        %827 = vmatprep.subr.bf16.mxu0 0
        %828 = vmatpush1.bf16.msra.mxu0 0
        %829 = vmatprep.subr.bf16.mxu0 0
        %830 = vmatpush1.bf16.msra.mxu0 0
        %831 = vmatprep.subr.bf16.mxu0 0
        %832 = vmatpush1.bf16.msra.mxu0 0
        %833 = vmatprep.subr.bf16.mxu0 0
        %834 = vmatpush1.bf16.msra.mxu0 0
        %835 = vmatprep.subr.bf16.mxu0 0
        %836 = vmatpush1.bf16.msra.mxu0 0
        %837 = vmatprep.subr.bf16.mxu0 0
        %838 = vmatpush1.bf16.msra.mxu0 0
        %839 = vmatprep.mubr.bf16.mxu0 %v805
        %840 = vmatmul.mubr.bf16.gmra.mrb[0].mxu0 %v800
        %v841 = vpop.f32.mrb[0].mxu0
        %v842 = vadd.f32 0.0, %v841
        %v843 = vpop.f32.mrb[0].mxu0
        %v844 = vadd.f32 0.0, %v843
        %v845 = vpop.f32.mrb[0].mxu0
        %v846 = vadd.f32 0.0, %v845
        %v847 = vpop.f32.mrb[0].mxu0
        %v848 = vadd.f32 0.0, %v847
        %849 = vdwg.mxu0
        %850 = vmatprep.subr.bf16.mxu0 %v761
        %851 = vmatpush1.bf16.msra.mxu0 %v760
        %852 = vmatprep.subr.bf16.mxu0 %v765
        %853 = vmatpush1.bf16.msra.mxu0 %v764
        %854 = vmatprep.subr.bf16.mxu0 %v769
        %855 = vmatpush1.bf16.msra.mxu0 %v768
        %856 = vmatprep.subr.bf16.mxu0 %v773
        %857 = vmatpush1.bf16.msra.mxu0 %v772
        %858 = vmatprep.subr.bf16.mxu0 %v777
        %859 = vmatpush1.bf16.msra.mxu0 %v776
        %860 = vmatprep.subr.bf16.mxu0 %v781
        %861 = vmatpush1.bf16.msra.mxu0 %v780
        %862 = vmatprep.subr.bf16.mxu0 %v785
        %863 = vmatpush1.bf16.msra.mxu0 %v784
        %864 = vmatprep.subr.bf16.mxu0 %v789
        %865 = vmatpush1.bf16.msra.mxu0 %v788
        %866 = vmatprep.subr.bf16.mxu0 %v793
        %867 = vmatpush1.bf16.msra.mxu0 %v792
        %868 = vmatprep.subr.bf16.mxu0 0
        %869 = vmatpush1.bf16.msra.mxu0 0
        %870 = vmatprep.subr.bf16.mxu0 0
        %871 = vmatpush1.bf16.msra.mxu0 0
        %872 = vmatprep.subr.bf16.mxu0 0
        %873 = vmatpush1.bf16.msra.mxu0 0
        %874 = vmatprep.subr.bf16.mxu0 0
        %875 = vmatpush1.bf16.msra.mxu0 0
        %876 = vmatprep.subr.bf16.mxu0 0
        %877 = vmatpush1.bf16.msra.mxu0 0
        %878 = vmatprep.subr.bf16.mxu0 0
        %879 = vmatpush1.bf16.msra.mxu0 0
        %880 = vmatprep.subr.bf16.mxu0 0
        %881 = vmatpush1.bf16.msra.mxu0 0
        %882 = vmatprep.mubr.bf16.mxu0 %v805
        %883 = vmatmul.mubr.bf16.gmra.mrb[0].mxu0 %v800
        %v884 = vpop.f32.mrb[0].mxu0
        %v885 = vadd.f32 0.0, %v884
        %v886 = vpop.f32.mrb[0].mxu0
        %v887 = vadd.f32 0.0, %v886
        %v888 = vpop.f32.mrb[0].mxu0
        %v889 = vadd.f32 0.0, %v888
        %v890 = vpop.f32.mrb[0].mxu0
        %v891 = vadd.f32 0.0, %v890
        %892 = vdwg.mxu0
        %v893 = vld [vmem:[%s2] sm:$0xff]
        %v894 = vld [vmem:[%s2 + $0x8] sm:$0xff]
        %v895 = vld [vmem:[%s3] sm:$0xff]
        %v896 = vld [vmem:[%s3 + $0x8] sm:$0xff]
        %v897 = vadd.f32 %v842, %v844
        %898 = vadd.xlane.f32.xlu0 %v897
        %v899 = vpop.xlane.xlu0 %898
        %v900 = vadd.f32 %v846, %v848
        %901 = vadd.xlane.f32.xlu0 %v900
        %v902 = vpop.xlane.xlu0 %901
        %v903 = vrcp.pop 256.0
        %v904 = vmul.f32 %v899, %v903
        %v905 = vmul.f32 %v902, %v903
        %v906 = vsub.f32 %v842, %v904
        %v907 = vsub.f32 %v844, %v904
        %v908 = vsub.f32 %v846, %v905
        %v909 = vsub.f32 %v848, %v905
        %v910 = vmul.f32 %v906, %v906
        %v911 = vmul.f32 %v907, %v907
        %v912 = vmul.f32 %v908, %v908
        %v913 = vmul.f32 %v909, %v909
        %v914 = vadd.f32 %v910, %v911
        %915 = vadd.xlane.f32.xlu0 %v914
        %v916 = vpop.xlane.xlu0 %915
        %v917 = vadd.f32 %v912, %v913
        %918 = vadd.xlane.f32.xlu0 %v917
        %v919 = vpop.xlane.xlu0 %918
        %v920 = vmul.f32 %v916, %v903
        %v921 = vmul.f32 %v919, %v903
        %v922 = vadd.f32 %v920, 1e-05
        %v923 = vadd.f32 %v921, 1e-05
        %v924 = vrsqrt.pop %v922
        %v925 = vrsqrt.pop %v923
        %v926 = vmul.f32 %v906, %v924
        %v927 = vmul.f32 %v907, %v924
        %v928 = vmul.f32 %v908, %v925
        %v929 = vmul.f32 %v909, %v925
        %931 = vset.pattern.permute.xlu0 0
        %932 = vperm.xlu0 %931, %v893
        %v933 = vpop.permute.xlu0 %932
        %936 = vset.pattern.permute.xlu0 0
        %937 = vperm.xlu0 %936, %v894
        %v938 = vpop.permute.xlu0 %937
        %v940 = vmul.f32 %v926, %v933
        %v941 = vmul.f32 %v927, %v933
        %v942 = vmul.f32 %v928, %v938
        %v943 = vmul.f32 %v929, %v938
        %945 = vset.pattern.permute.xlu0 0
        %946 = vperm.xlu0 %945, %v895
        %v947 = vpop.permute.xlu0 %946
        %950 = vset.pattern.permute.xlu0 0
        %951 = vperm.xlu0 %950, %v896
        %v952 = vpop.permute.xlu0 %951
        %v954 = vadd.f32 %v940, %v947
        %v955 = vadd.f32 %v941, %v947
        %v956 = vadd.f32 %v942, %v952
        %v957 = vadd.f32 %v943, %v952
        %v958 = vmax.f32 %v954, 0.0
        %v959 = vmax.f32 %v955, 0.0
        %v960 = vmax.f32 %v956, 0.0
        %v961 = vmax.f32 %v957, 0.0
        %v962 = vpack.c.bf16 %v960, %v958
        %v963 = vpack.c.bf16 %v961, %v959
        %964 = vst [vmem:[#allocation2 + $0x8] sm:$0xff] %v962
        %965 = vst [vmem:[#allocation2 + $0x10] sm:$0xff] %v963
        %v966 = vld [vmem:[#allocation2] sm:$0xff]
        %v967 = vld [vmem:[#allocation2 + $0x8] sm:$0xff]
        %v968 = vld [vmem:[#allocation2 + $0x10] sm:$0xff]
        %v969 = vsel %vm354, %v966, 0
        %v970 = vsel %vm355, %v967, 0
        %v971 = vsel %vm356, %v968, 0
        %975 = vrot.lane.b32.xlu0 %v969, 17
        %v976 = vpop.permute.xlu0 %975
        %977 = vrot.lane.b32.xlu0 %v970, 17
        %v978 = vpop.permute.xlu0 %977
        %979 = vrot.lane.b32.xlu0 %v971, 17
        %v980 = vpop.permute.xlu0 %979
        %v981 = vsel %vm369, %v976, %v978
        %v982 = vsel %vm369, %v978, %v980
        %985 = vst [vmem:[#allocation3] sm:$0xff] %v981
        %986 = vst [vmem:[#allocation3 + $0x8] sm:$0xff] %v982
        %v987 = vld [vmem:[#allocation2] sm:$0xff]
        %v988 = vld [vmem:[#allocation2 + $0x8] sm:$0xff]
        %v989 = vld [vmem:[#allocation2 + $0x10] sm:$0xff]
        %993 = vrot.lane.b32.xlu0 %v987, 16
        %v994 = vpop.permute.xlu0 %993
        %995 = vrot.lane.b32.xlu0 %v988, 16
        %v996 = vpop.permute.xlu0 %995
        %997 = vrot.lane.b32.xlu0 %v989, 16
        %v998 = vpop.permute.xlu0 %997
        %v999 = vsel %vm388, %v994, %v996
        %v1000 = vsel %vm388, %v996, %v998
        %1003 = vst [vmem:[#allocation3 + $0x20] sm:$0xff] %v999
        %1004 = vst [vmem:[#allocation3 + $0x28] sm:$0xff] %v1000
        %v1005 = vld [vmem:[#allocation2] sm:$0xff]
        %v1006 = vld [vmem:[#allocation2 + $0x8] sm:$0xff]
        %v1007 = vld [vmem:[#allocation2 + $0x10] sm:$0xff]
        %v1008 = vsel %vm418, %v1005, 0
        %v1009 = vsel %vm419, %v1006, 0
        %v1010 = vsel %vm420, %v1007, 0
        %1014 = vrot.lane.b32.xlu0 %v1008, 15
        %v1015 = vpop.permute.xlu0 %1014
        %1016 = vrot.lane.b32.xlu0 %v1009, 15
        %v1017 = vpop.permute.xlu0 %1016
        %1018 = vrot.lane.b32.xlu0 %v1010, 15
        %v1019 = vpop.permute.xlu0 %1018
        %v1020 = vsel %vm433, %v1015, %v1017
        %v1021 = vsel %vm433, %v1017, %v1019
        %1024 = vst [vmem:[#allocation3 + $0x40] sm:$0xff] %v1020
        %1025 = vst [vmem:[#allocation3 + $0x48] sm:$0xff] %v1021
        %v1026 = vld [vmem:[#allocation2] sm:$0xff]
        %v1027 = vld [vmem:[#allocation2 + $0x8] sm:$0xff]
        %v1028 = vld [vmem:[#allocation2 + $0x10] sm:$0xff]
        %v1029 = vsel %vm449, %v1026, 0
        %v1030 = vsel %vm450, %v1027, 0
        %v1031 = vsel %vm451, %v1028, 0
        %1035 = vrot.lane.b32.xlu0 %v1029, 1
        %v1036 = vpop.permute.xlu0 %1035
        %1037 = vrot.lane.b32.xlu0 %v1030, 1
        %v1038 = vpop.permute.xlu0 %1037
        %1039 = vrot.lane.b32.xlu0 %v1031, 1
        %v1040 = vpop.permute.xlu0 %1039
        %v1041 = vsel %vm464, %v1036, %v1038
        %v1042 = vsel %vm464, %v1038, %v1040
        %1045 = vst [vmem:[#allocation3 + $0x60] sm:$0xff] %v1041
        %1046 = vst [vmem:[#allocation3 + $0x68] sm:$0xff] %v1042
        %v1047 = vld [vmem:[#allocation2 + $0x8] sm:$0xff]
        %v1048 = vld [vmem:[#allocation2 + $0x10] sm:$0xff]
        %1049 = vst [vmem:[#allocation3 + $0x80] sm:$0xff] %v1047
        %1050 = vst [vmem:[#allocation3 + $0x88] sm:$0xff] %v1048
        %v1051 = vld [vmem:[#allocation2 + $0x8] sm:$0xff]
        %v1052 = vld [vmem:[#allocation2 + $0x10] sm:$0xff]
        %v1053 = vld [vmem:[#allocation2 + $0x18] sm:$0xff]
        %v1054 = vsel %vm483, %v1051, 0
        %v1055 = vsel %vm484, %v1052, 0
        %v1056 = vsel %vm485, %v1053, 0
        %1060 = vrot.lane.b32.xlu0 %v1054, 127
        %v1061 = vpop.permute.xlu0 %1060
        %1062 = vrot.lane.b32.xlu0 %v1055, 127
        %v1063 = vpop.permute.xlu0 %1062
        %1064 = vrot.lane.b32.xlu0 %v1056, 127
        %v1065 = vpop.permute.xlu0 %1064
        %v1066 = vsel %vm447, %v1061, %v1063
        %v1067 = vsel %vm447, %v1063, %v1065
        %1070 = vst [vmem:[#allocation3 + $0xa0] sm:$0xff] %v1066
        %1071 = vst [vmem:[#allocation3 + $0xa8] sm:$0xff] %v1067
        %v1072 = vld [vmem:[#allocation2 + $0x8] sm:$0xff]
        %v1073 = vld [vmem:[#allocation2 + $0x10] sm:$0xff]
        %v1074 = vld [vmem:[#allocation2 + $0x18] sm:$0xff]
        %v1075 = vsel %vm512, %v1072, 0
        %v1076 = vsel %vm513, %v1073, 0
        %v1077 = vsel %vm514, %v1074, 0
        %1081 = vrot.lane.b32.xlu0 %v1075, 113
        %v1082 = vpop.permute.xlu0 %1081
        %1083 = vrot.lane.b32.xlu0 %v1076, 113
        %v1084 = vpop.permute.xlu0 %1083
        %1085 = vrot.lane.b32.xlu0 %v1077, 113
        %v1086 = vpop.permute.xlu0 %1085
        %v1087 = vsel %vm416, %v1082, %v1084
        %v1088 = vsel %vm416, %v1084, %v1086
        %1091 = vst [vmem:[#allocation3 + $0xc0] sm:$0xff] %v1087
        %1092 = vst [vmem:[#allocation3 + $0xc8] sm:$0xff] %v1088
        %v1093 = vld [vmem:[#allocation2 + $0x8] sm:$0xff]
        %v1094 = vld [vmem:[#allocation2 + $0x10] sm:$0xff]
        %v1095 = vld [vmem:[#allocation2 + $0x18] sm:$0xff]
        %1099 = vrot.lane.b32.xlu0 %v1093, 112
        %v1100 = vpop.permute.xlu0 %1099
        %1101 = vrot.lane.b32.xlu0 %v1094, 112
        %v1102 = vpop.permute.xlu0 %1101
        %1103 = vrot.lane.b32.xlu0 %v1095, 112
        %v1104 = vpop.permute.xlu0 %1103
        %v1105 = vsel %vm545, %v1100, %v1102
        %v1106 = vsel %vm545, %v1102, %v1104
        %1109 = vst [vmem:[#allocation3 + $0xe0] sm:$0xff] %v1105
        %1110 = vst [vmem:[#allocation3 + $0xe8] sm:$0xff] %v1106
        %v1111 = vld [vmem:[#allocation2 + $0x8] sm:$0xff]
        %v1112 = vld [vmem:[#allocation2 + $0x10] sm:$0xff]
        %v1113 = vld [vmem:[#allocation2 + $0x18] sm:$0xff]
        %v1114 = vsel %vm560, %v1111, 0
        %v1115 = vsel %vm561, %v1112, 0
        %v1116 = vsel %vm562, %v1113, 0
        %1120 = vrot.lane.b32.xlu0 %v1114, 111
        %v1121 = vpop.permute.xlu0 %1120
        %1122 = vrot.lane.b32.xlu0 %v1115, 111
        %v1123 = vpop.permute.xlu0 %1122
        %1124 = vrot.lane.b32.xlu0 %v1116, 111
        %v1125 = vpop.permute.xlu0 %1124
        %v1126 = vsel %vm352, %v1121, %v1123
        %v1127 = vsel %vm352, %v1123, %v1125
        %1130 = vst [vmem:[#allocation3 + $0x100] sm:$0xff] %v1126
        %1131 = vst [vmem:[#allocation3 + $0x108] sm:$0xff] %v1127
        %v1132 = vld [vmem:[%s2] sm:$0xff]
        %v1133 = vld [vmem:[%s2 + $0x8] sm:$0xff]
        %v1134 = vld [vmem:[%s3] sm:$0xff]
        %v1135 = vld [vmem:[%s3 + $0x8] sm:$0xff]
        %v1136 = vadd.f32 %v885, %v887
        %1137 = vadd.xlane.f32.xlu0 %v1136
        %v1138 = vpop.xlane.xlu0 %1137
        %v1139 = vadd.f32 %v889, %v891
        %1140 = vadd.xlane.f32.xlu0 %v1139
        %v1141 = vpop.xlane.xlu0 %1140
        %v1142 = vmul.f32 %v1138, %v903
        %v1143 = vmul.f32 %v1141, %v903
        %v1144 = vsub.f32 %v885, %v1142
        %v1145 = vsub.f32 %v887, %v1142
        %v1146 = vsub.f32 %v889, %v1143
        %v1147 = vsub.f32 %v891, %v1143
        %v1148 = vmul.f32 %v1144, %v1144
        %v1149 = vmul.f32 %v1145, %v1145
        %v1150 = vmul.f32 %v1146, %v1146
        %v1151 = vmul.f32 %v1147, %v1147
        %v1152 = vadd.f32 %v1148, %v1149
        %1153 = vadd.xlane.f32.xlu0 %v1152
        %v1154 = vpop.xlane.xlu0 %1153
        %v1155 = vadd.f32 %v1150, %v1151
        %1156 = vadd.xlane.f32.xlu0 %v1155
        %v1157 = vpop.xlane.xlu0 %1156
        %v1158 = vmul.f32 %v1154, %v903
        %v1159 = vmul.f32 %v1157, %v903
        %v1160 = vadd.f32 %v1158, 1e-05
        %v1161 = vadd.f32 %v1159, 1e-05
        %v1162 = vrsqrt.pop %v1160
        %v1163 = vrsqrt.pop %v1161
        %v1164 = vmul.f32 %v1144, %v1162
        %v1165 = vmul.f32 %v1145, %v1162
        %v1166 = vmul.f32 %v1146, %v1163
        %v1167 = vmul.f32 %v1147, %v1163
        %1169 = vset.pattern.permute.xlu0 0
        %1170 = vperm.xlu0 %1169, %v1132
        %v1171 = vpop.permute.xlu0 %1170
        %1174 = vset.pattern.permute.xlu0 0
        %1175 = vperm.xlu0 %1174, %v1133
        %v1176 = vpop.permute.xlu0 %1175
        %v1178 = vmul.f32 %v1164, %v1171
        %v1179 = vmul.f32 %v1165, %v1171
        %v1180 = vmul.f32 %v1166, %v1176
        %v1181 = vmul.f32 %v1167, %v1176
        %1183 = vset.pattern.permute.xlu0 0
        %1184 = vperm.xlu0 %1183, %v1134
        %v1185 = vpop.permute.xlu0 %1184
        %1188 = vset.pattern.permute.xlu0 0
        %1189 = vperm.xlu0 %1188, %v1135
        %v1190 = vpop.permute.xlu0 %1189
        %v1192 = vadd.f32 %v1178, %v1185
        %v1193 = vadd.f32 %v1179, %v1185
        %v1194 = vadd.f32 %v1180, %v1190
        %v1195 = vadd.f32 %v1181, %v1190
        %v1196 = vmax.f32 %v1192, 0.0
        %v1197 = vmax.f32 %v1193, 0.0
        %v1198 = vmax.f32 %v1194, 0.0
        %v1199 = vmax.f32 %v1195, 0.0
        %v1200 = vpack.c.bf16 %v1198, %v1196
        %v1201 = vpack.c.bf16 %v1199, %v1197
        %1202 = vst [vmem:[#allocation2 + $0x8] sm:$0xff] %v1200
        %1203 = vst [vmem:[#allocation2 + $0x10] sm:$0xff] %v1201
        %v1204 = vld [vmem:[#allocation2] sm:$0xff]
        %v1205 = vld [vmem:[#allocation2 + $0x8] sm:$0xff]
        %v1206 = vld [vmem:[#allocation2 + $0x10] sm:$0xff]
        %v1207 = vsel %vm354, %v1204, 0
        %v1208 = vsel %vm355, %v1205, 0
        %v1209 = vsel %vm356, %v1206, 0
        %1213 = vrot.lane.b32.xlu0 %v1207, 17
        %v1214 = vpop.permute.xlu0 %1213
        %1215 = vrot.lane.b32.xlu0 %v1208, 17
        %v1216 = vpop.permute.xlu0 %1215
        %1217 = vrot.lane.b32.xlu0 %v1209, 17
        %v1218 = vpop.permute.xlu0 %1217
        %v1219 = vsel %vm369, %v1214, %v1216
        %v1220 = vsel %vm369, %v1216, %v1218
        %1223 = vst [vmem:[#allocation3 + $0x10] sm:$0xff] %v1219
        %1224 = vst [vmem:[#allocation3 + $0x18] sm:$0xff] %v1220
        %v1225 = vld [vmem:[#allocation2] sm:$0xff]
        %v1226 = vld [vmem:[#allocation2 + $0x8] sm:$0xff]
        %v1227 = vld [vmem:[#allocation2 + $0x10] sm:$0xff]
        %1231 = vrot.lane.b32.xlu0 %v1225, 16
        %v1232 = vpop.permute.xlu0 %1231
        %1233 = vrot.lane.b32.xlu0 %v1226, 16
        %v1234 = vpop.permute.xlu0 %1233
        %1235 = vrot.lane.b32.xlu0 %v1227, 16
        %v1236 = vpop.permute.xlu0 %1235
        %v1237 = vsel %vm388, %v1232, %v1234
        %v1238 = vsel %vm388, %v1234, %v1236
        %1241 = vst [vmem:[#allocation3 + $0x30] sm:$0xff] %v1237
        %1242 = vst [vmem:[#allocation3 + $0x38] sm:$0xff] %v1238
        %v1243 = vld [vmem:[#allocation2] sm:$0xff]
        %v1244 = vld [vmem:[#allocation2 + $0x8] sm:$0xff]
        %v1245 = vld [vmem:[#allocation2 + $0x10] sm:$0xff]
        %v1246 = vsel %vm418, %v1243, 0
        %v1247 = vsel %vm419, %v1244, 0
        %v1248 = vsel %vm420, %v1245, 0
        %1252 = vrot.lane.b32.xlu0 %v1246, 15
        %v1253 = vpop.permute.xlu0 %1252
        %1254 = vrot.lane.b32.xlu0 %v1247, 15
        %v1255 = vpop.permute.xlu0 %1254
        %1256 = vrot.lane.b32.xlu0 %v1248, 15
        %v1257 = vpop.permute.xlu0 %1256
        %v1258 = vsel %vm433, %v1253, %v1255
        %v1259 = vsel %vm433, %v1255, %v1257
        %1262 = vst [vmem:[#allocation3 + $0x50] sm:$0xff] %v1258
        %1263 = vst [vmem:[#allocation3 + $0x58] sm:$0xff] %v1259
        %v1264 = vld [vmem:[#allocation2] sm:$0xff]
        %v1265 = vld [vmem:[#allocation2 + $0x8] sm:$0xff]
        %v1266 = vld [vmem:[#allocation2 + $0x10] sm:$0xff]
        %v1267 = vsel %vm449, %v1264, 0
        %v1268 = vsel %vm450, %v1265, 0
        %v1269 = vsel %vm451, %v1266, 0
        %1273 = vrot.lane.b32.xlu0 %v1267, 1
        %v1274 = vpop.permute.xlu0 %1273
        %1275 = vrot.lane.b32.xlu0 %v1268, 1
        %v1276 = vpop.permute.xlu0 %1275
        %1277 = vrot.lane.b32.xlu0 %v1269, 1
        %v1278 = vpop.permute.xlu0 %1277
        %v1279 = vsel %vm464, %v1274, %v1276
        %v1280 = vsel %vm464, %v1276, %v1278
        %1283 = vst [vmem:[#allocation3 + $0x70] sm:$0xff] %v1279
        %1284 = vst [vmem:[#allocation3 + $0x78] sm:$0xff] %v1280
        %v1285 = vld [vmem:[#allocation2 + $0x8] sm:$0xff]
        %v1286 = vld [vmem:[#allocation2 + $0x10] sm:$0xff]
        %1287 = vst [vmem:[#allocation3 + $0x90] sm:$0xff] %v1285
        %1288 = vst [vmem:[#allocation3 + $0x98] sm:$0xff] %v1286
        %v1289 = vld [vmem:[#allocation2 + $0x8] sm:$0xff]
        %v1290 = vld [vmem:[#allocation2 + $0x10] sm:$0xff]
        %v1291 = vld [vmem:[#allocation2 + $0x18] sm:$0xff]
        %v1292 = vsel %vm483, %v1289, 0
        %v1293 = vsel %vm484, %v1290, 0
        %v1294 = vsel %vm485, %v1291, 0
        %1298 = vrot.lane.b32.xlu0 %v1292, 127
        %v1299 = vpop.permute.xlu0 %1298
        %1300 = vrot.lane.b32.xlu0 %v1293, 127
        %v1301 = vpop.permute.xlu0 %1300
        %1302 = vrot.lane.b32.xlu0 %v1294, 127
        %v1303 = vpop.permute.xlu0 %1302
        %v1304 = vsel %vm447, %v1299, %v1301
        %v1305 = vsel %vm447, %v1301, %v1303
        %1308 = vst [vmem:[#allocation3 + $0xb0] sm:$0xff] %v1304
        %1309 = vst [vmem:[#allocation3 + $0xb8] sm:$0xff] %v1305
        %v1310 = vld [vmem:[#allocation2 + $0x8] sm:$0xff]
        %v1311 = vld [vmem:[#allocation2 + $0x10] sm:$0xff]
        %v1312 = vld [vmem:[#allocation2 + $0x18] sm:$0xff]
        %v1313 = vsel %vm512, %v1310, 0
        %v1314 = vsel %vm513, %v1311, 0
        %v1315 = vsel %vm514, %v1312, 0
        %1319 = vrot.lane.b32.xlu0 %v1313, 113
        %v1320 = vpop.permute.xlu0 %1319
        %1321 = vrot.lane.b32.xlu0 %v1314, 113
        %v1322 = vpop.permute.xlu0 %1321
        %1323 = vrot.lane.b32.xlu0 %v1315, 113
        %v1324 = vpop.permute.xlu0 %1323
        %v1325 = vsel %vm416, %v1320, %v1322
        %v1326 = vsel %vm416, %v1322, %v1324
        %1329 = vst [vmem:[#allocation3 + $0xd0] sm:$0xff] %v1325
        %1330 = vst [vmem:[#allocation3 + $0xd8] sm:$0xff] %v1326
        %v1331 = vld [vmem:[#allocation2 + $0x8] sm:$0xff]
        %v1332 = vld [vmem:[#allocation2 + $0x10] sm:$0xff]
        %v1333 = vld [vmem:[#allocation2 + $0x18] sm:$0xff]
        %1337 = vrot.lane.b32.xlu0 %v1331, 112
        %v1338 = vpop.permute.xlu0 %1337
        %1339 = vrot.lane.b32.xlu0 %v1332, 112
        %v1340 = vpop.permute.xlu0 %1339
        %1341 = vrot.lane.b32.xlu0 %v1333, 112
        %v1342 = vpop.permute.xlu0 %1341
        %v1343 = vsel %vm545, %v1338, %v1340
        %v1344 = vsel %vm545, %v1340, %v1342
        %1347 = vst [vmem:[#allocation3 + $0xf0] sm:$0xff] %v1343
        %1348 = vst [vmem:[#allocation3 + $0xf8] sm:$0xff] %v1344
        %v1349 = vld [vmem:[#allocation2 + $0x8] sm:$0xff]
        %v1350 = vld [vmem:[#allocation2 + $0x10] sm:$0xff]
        %v1351 = vld [vmem:[#allocation2 + $0x18] sm:$0xff]
        %v1352 = vsel %vm560, %v1349, 0
        %v1353 = vsel %vm561, %v1350, 0
        %v1354 = vsel %vm562, %v1351, 0
        %1358 = vrot.lane.b32.xlu0 %v1352, 111
        %v1359 = vpop.permute.xlu0 %1358
        %1360 = vrot.lane.b32.xlu0 %v1353, 111
        %v1361 = vpop.permute.xlu0 %1360
        %1362 = vrot.lane.b32.xlu0 %v1354, 111
        %v1363 = vpop.permute.xlu0 %1362
        %v1364 = vsel %vm352, %v1359, %v1361
        %v1365 = vsel %vm352, %v1361, %v1363
        %1368 = vst [vmem:[#allocation3 + $0x110] sm:$0xff] %v1364
        %1369 = vst [vmem:[#allocation3 + $0x118] sm:$0xff] %v1365
        %v1370 = vld [vmem:[%s4] sm:$0xff]
        %v1371 = vld [vmem:[%s4 + $0x8] sm:$0xff]
        %v1372 = vld [vmem:[#allocation3] sm:$0xff]
        %v1373 = vld [vmem:[#allocation3 + $0x8] sm:$0xff]
        %v1374 = vld [vmem:[#allocation3 + $0x10] sm:$0xff]
        %v1375 = vld [vmem:[#allocation3 + $0x18] sm:$0xff]
        %v1376 = vld [vmem:[#allocation3 + $0x20] sm:$0xff]
        %v1377 = vld [vmem:[#allocation3 + $0x28] sm:$0xff]
        %v1378 = vld [vmem:[#allocation3 + $0x30] sm:$0xff]
        %v1379 = vld [vmem:[#allocation3 + $0x38] sm:$0xff]
        %v1380 = vld [vmem:[#allocation3 + $0x40] sm:$0xff]
        %v1381 = vld [vmem:[#allocation3 + $0x48] sm:$0xff]
        %v1382 = vld [vmem:[#allocation3 + $0x50] sm:$0xff]
        %v1383 = vld [vmem:[#allocation3 + $0x58] sm:$0xff]
        %v1384 = vld [vmem:[#allocation3 + $0x60] sm:$0xff]
        %v1385 = vld [vmem:[#allocation3 + $0x68] sm:$0xff]
        %v1386 = vld [vmem:[#allocation3 + $0x70] sm:$0xff]
        %v1387 = vld [vmem:[#allocation3 + $0x78] sm:$0xff]
        %v1388 = vld [vmem:[#allocation3 + $0x80] sm:$0xff]
        %v1389 = vld [vmem:[#allocation3 + $0x88] sm:$0xff]
        %v1390 = vld [vmem:[#allocation3 + $0x90] sm:$0xff]
        %v1391 = vld [vmem:[#allocation3 + $0x98] sm:$0xff]
        %v1392 = vld [vmem:[#allocation3 + $0xa0] sm:$0xff]
        %v1393 = vld [vmem:[#allocation3 + $0xa8] sm:$0xff]
        %v1394 = vld [vmem:[#allocation3 + $0xb0] sm:$0xff]
        %v1395 = vld [vmem:[#allocation3 + $0xb8] sm:$0xff]
        %v1396 = vld [vmem:[#allocation3 + $0xc0] sm:$0xff]
        %v1397 = vld [vmem:[#allocation3 + $0xc8] sm:$0xff]
        %v1398 = vld [vmem:[#allocation3 + $0xd0] sm:$0xff]
        %v1399 = vld [vmem:[#allocation3 + $0xd8] sm:$0xff]
        %v1400 = vld [vmem:[#allocation3 + $0xe0] sm:$0xff]
        %v1401 = vld [vmem:[#allocation3 + $0xe8] sm:$0xff]
        %v1402 = vld [vmem:[#allocation3 + $0xf0] sm:$0xff]
        %v1403 = vld [vmem:[#allocation3 + $0xf8] sm:$0xff]
        %v1404 = vld [vmem:[#allocation3 + $0x100] sm:$0xff]
        %v1405 = vld [vmem:[#allocation3 + $0x108] sm:$0xff]
        %v1406 = vld [vmem:[#allocation3 + $0x110] sm:$0xff]
        %v1407 = vld [vmem:[#allocation3 + $0x118] sm:$0xff]
        %v1410 = vunpack.c.l.b16 %v1370
        %v1411 = vunpack.c.h.b16 %v1370
        %v1412 = vunpack.c.l.b16 %v1371
        %v1413 = vunpack.c.h.b16 %v1371
        %v1414 = vpack.c.b16 %v1412, %v1410
        %v1415 = vpack.c.b16 %v1413, %v1411
        %v1418 = vsel %vm803, %v1415, 0
        %1420 = vmatprep.subr.bf16.mxu0 %v1373
        %1421 = vmatpush1.bf16.msra.mxu0 %v1372
        %1422 = vmatprep.subr.bf16.mxu0 %v1377
        %1423 = vmatpush1.bf16.msra.mxu0 %v1376
        %1424 = vmatprep.subr.bf16.mxu0 %v1381
        %1425 = vmatpush1.bf16.msra.mxu0 %v1380
        %1426 = vmatprep.subr.bf16.mxu0 %v1385
        %1427 = vmatpush1.bf16.msra.mxu0 %v1384
        %1428 = vmatprep.subr.bf16.mxu0 %v1389
        %1429 = vmatpush1.bf16.msra.mxu0 %v1388
        %1430 = vmatprep.subr.bf16.mxu0 %v1393
        %1431 = vmatpush1.bf16.msra.mxu0 %v1392
        %1432 = vmatprep.subr.bf16.mxu0 %v1397
        %1433 = vmatpush1.bf16.msra.mxu0 %v1396
        %1434 = vmatprep.subr.bf16.mxu0 %v1401
        %1435 = vmatpush1.bf16.msra.mxu0 %v1400
        %1436 = vmatprep.subr.bf16.mxu0 %v1405
        %1437 = vmatpush1.bf16.msra.mxu0 %v1404
        %1438 = vmatprep.subr.bf16.mxu0 0
        %1439 = vmatpush1.bf16.msra.mxu0 0
        %1440 = vmatprep.subr.bf16.mxu0 0
        %1441 = vmatpush1.bf16.msra.mxu0 0
        %1442 = vmatprep.subr.bf16.mxu0 0
        %1443 = vmatpush1.bf16.msra.mxu0 0
        %1444 = vmatprep.subr.bf16.mxu0 0
        %1445 = vmatpush1.bf16.msra.mxu0 0
        %1446 = vmatprep.subr.bf16.mxu0 0
        %1447 = vmatpush1.bf16.msra.mxu0 0
        %1448 = vmatprep.subr.bf16.mxu0 0
        %1449 = vmatpush1.bf16.msra.mxu0 0
        %1450 = vmatprep.subr.bf16.mxu0 0
        %1451 = vmatpush1.bf16.msra.mxu0 0
        %1452 = vmatprep.mubr.bf16.mxu0 %v1418
        %1453 = vmatmul.mubr.bf16.gmra.mrb[0].mxu0 %v1414
        %v1454 = vpop.f32.mrb[0].mxu0
        %v1455 = vadd.f32 0.0, %v1454
        %v1456 = vpop.f32.mrb[0].mxu0
        %v1457 = vadd.f32 0.0, %v1456
        %v1458 = vpop.f32.mrb[0].mxu0
        %v1459 = vpop.f32.mrb[0].mxu0
        %1460 = vdwg.mxu0
        %1461 = vmatprep.subr.bf16.mxu0 %v1375
        %1462 = vmatpush1.bf16.msra.mxu0 %v1374
        %1463 = vmatprep.subr.bf16.mxu0 %v1379
        %1464 = vmatpush1.bf16.msra.mxu0 %v1378
        %1465 = vmatprep.subr.bf16.mxu0 %v1383
        %1466 = vmatpush1.bf16.msra.mxu0 %v1382
        %1467 = vmatprep.subr.bf16.mxu0 %v1387
        %1468 = vmatpush1.bf16.msra.mxu0 %v1386
        %1469 = vmatprep.subr.bf16.mxu0 %v1391
        %1470 = vmatpush1.bf16.msra.mxu0 %v1390
        %1471 = vmatprep.subr.bf16.mxu0 %v1395
        %1472 = vmatpush1.bf16.msra.mxu0 %v1394
        %1473 = vmatprep.subr.bf16.mxu0 %v1399
        %1474 = vmatpush1.bf16.msra.mxu0 %v1398
        %1475 = vmatprep.subr.bf16.mxu0 %v1403
        %1476 = vmatpush1.bf16.msra.mxu0 %v1402
        %1477 = vmatprep.subr.bf16.mxu0 %v1407
        %1478 = vmatpush1.bf16.msra.mxu0 %v1406
        %1479 = vmatprep.subr.bf16.mxu0 0
        %1480 = vmatpush1.bf16.msra.mxu0 0
        %1481 = vmatprep.subr.bf16.mxu0 0
        %1482 = vmatpush1.bf16.msra.mxu0 0
        %1483 = vmatprep.subr.bf16.mxu0 0
        %1484 = vmatpush1.bf16.msra.mxu0 0
        %1485 = vmatprep.subr.bf16.mxu0 0
        %1486 = vmatpush1.bf16.msra.mxu0 0
        %1487 = vmatprep.subr.bf16.mxu0 0
        %1488 = vmatpush1.bf16.msra.mxu0 0
        %1489 = vmatprep.subr.bf16.mxu0 0
        %1490 = vmatpush1.bf16.msra.mxu0 0
        %1491 = vmatprep.subr.bf16.mxu0 0
        %1492 = vmatpush1.bf16.msra.mxu0 0
        %1493 = vmatprep.mubr.bf16.mxu0 %v1418
        %1494 = vmatmul.mubr.bf16.gmra.mrb[0].mxu0 %v1414
        %v1495 = vpop.f32.mrb[0].mxu0
        %v1496 = vadd.f32 0.0, %v1495
        %v1497 = vpop.f32.mrb[0].mxu0
        %v1498 = vadd.f32 0.0, %v1497
        %v1499 = vpop.f32.mrb[0].mxu0
        %v1500 = vpop.f32.mrb[0].mxu0
        %1501 = vdwg.mxu0
        %v1502 = vld [vmem:[%s5] sm:$0xff]
        %v1503 = vld [vmem:[%s6] sm:$0xff]
        %v1504 = vadd.f32 %v1455, %v1457
        %1505 = vadd.xlane.f32.xlu0 %v1504
        %v1506 = vpop.xlane.xlu0 %1505
        %v1507 = vmul.f32 %v1506, %v903
        %v1508 = vsub.f32 %v1455, %v1507
        %v1509 = vsub.f32 %v1457, %v1507
        %v1510 = vmul.f32 %v1508, %v1508
        %v1511 = vmul.f32 %v1509, %v1509
        %v1512 = vadd.f32 %v1510, %v1511
        %1513 = vadd.xlane.f32.xlu0 %v1512
        %v1514 = vpop.xlane.xlu0 %1513
        %v1515 = vmul.f32 %v1514, %v903
        %v1516 = vadd.f32 %v1515, 1e-05
        %v1517 = vrsqrt.pop %v1516
        %v1518 = vmul.f32 %v1508, %v1517
        %v1519 = vmul.f32 %v1509, %v1517
        %1521 = vset.pattern.permute.xlu0 0
        %1522 = vperm.xlu0 %1521, %v1502
        %v1523 = vpop.permute.xlu0 %1522
        %v1525 = vmul.f32 %v1518, %v1523
        %v1526 = vmul.f32 %v1519, %v1523
        %1528 = vset.pattern.permute.xlu0 0
        %1529 = vperm.xlu0 %1528, %v1503
        %v1530 = vpop.permute.xlu0 %1529
        %v1532 = vadd.f32 %v1525, %v1530
        %v1533 = vadd.f32 %v1526, %v1530
        %v1534 = vmax.f32 %v1532, 0.0
        %v1535 = vmax.f32 %v1533, 0.0
        %1536 = vst [vmem:[%s274] sm:$0xff] %v1534
        %1537 = vst [vmem:[%s274 + $0x8] sm:$0xff] %v1535
        %v1538 = vld [vmem:[%s5] sm:$0xff]
        %v1539 = vld [vmem:[%s6] sm:$0xff]
        %v1540 = vadd.f32 %v1496, %v1498
        %1541 = vadd.xlane.f32.xlu0 %v1540
        %v1542 = vpop.xlane.xlu0 %1541
        %v1543 = vmul.f32 %v1542, %v903
        %v1544 = vsub.f32 %v1496, %v1543
        %v1545 = vsub.f32 %v1498, %v1543
        %v1546 = vmul.f32 %v1544, %v1544
        %v1547 = vmul.f32 %v1545, %v1545
        %v1548 = vadd.f32 %v1546, %v1547
        %1549 = vadd.xlane.f32.xlu0 %v1548
        %v1550 = vpop.xlane.xlu0 %1549
        %v1551 = vmul.f32 %v1550, %v903
        %v1552 = vadd.f32 %v1551, 1e-05
        %v1553 = vrsqrt.pop %v1552
        %v1554 = vmul.f32 %v1544, %v1553
        %v1555 = vmul.f32 %v1545, %v1553
        %1557 = vset.pattern.permute.xlu0 0
        %1558 = vperm.xlu0 %1557, %v1538
        %v1559 = vpop.permute.xlu0 %1558
        %v1561 = vmul.f32 %v1554, %v1559
        %v1562 = vmul.f32 %v1555, %v1559
        %1564 = vset.pattern.permute.xlu0 0
        %1565 = vperm.xlu0 %1564, %v1539
        %v1566 = vpop.permute.xlu0 %1565
        %v1568 = vadd.f32 %v1561, %v1566
        %v1569 = vadd.f32 %v1562, %v1566
        %v1570 = vmax.f32 %v1568, 0.0
        %v1571 = vmax.f32 %v1569, 0.0
        %s1572 = scalar_lea.vmem %s274, 16 [#allocation4]
        %1573 = vst [vmem:[%s1572] sm:$0xff] %v1570
        %1574 = vst [vmem:[%s1572 + $0x8] sm:$0xff] %v1571
        %s1575 = sand.u32 %s181, 1
        %s1576 = scalar_lea.sflag [#allocation5], %s1575
        %s1577 = sand.u32 %s181, 1
        %s1578 = smul.addr %s1577, 32
        %s1579 = scalar_lea.vmem [#allocation4], %s1578
        // Predicated region
        $region49: #{tpu_custom_call.1} parent=47 // pred_check
          %p1580 = pneg %p191
        $region50: #{tpu_custom_call.1} parent=47 // pred_check_branch
          %1582 = sbr.rel (%p1580) target = $region52
        $region51: #{tpu_custom_call.1} parent=47 // pred_region
          %s1583 = smul.u32 2, %s21
          %s1585 = ssub.s32 512, 512
          %1586 = vsyncadd %s1576, %s1585
          %s1587 = smul.addr %s1583, 2
          %s1588 = smul.addr %s1587, 128
          %s1589 = scalar_lea.hbm %s7, %s1588
          %s1590 = sshll.u32 %s1579, 4
          %s1591 = int_to_ptr.vmem [resolvable:$true] %s1590
          %1596 = dma.vmem_to_hbm [thread:$0]  %s1591, 512, %s1589, %s1576, 256, 256, 16
        $region52: #{tpu_custom_call.1} parent=47 // pred_fallthru
          _
      $region48: #{tpu_custom_call.1} parent=5 // pred_fallthru
        _
      %p1597 = scmp.le.s32.totalorder 2, %s16
      // Predicated region
      $region53: #{tpu_custom_call.1} parent=5 // pred_check
        %p1598 = pneg %p1597
      $region54: #{tpu_custom_call.1} parent=5 // pred_check_branch
        %1600 = sbr.rel (%p1598) target = $region56
      $region55: #{tpu_custom_call.1} parent=5 // pred_region
        %s1601 = ssub.s32 %s16, 2
        // Predicated region
        $region57: #{tpu_custom_call.1} parent=55 // pred_check
          %p1602 = pneg %p197
        $region58: #{tpu_custom_call.1} parent=55 // pred_check_branch
          %1604 = sbr.rel (%p1602) target = $region60
        $region59: #{tpu_custom_call.1} parent=55 // pred_region
          %s1605 = sand.u32 %s182, 1
          %s1606 = scalar_lea.sflag [#allocation5], %s1605
          %s1607 = sand.u32 %s182, 1
          %s1608 = smul.addr %s1607, 32
          %s1609 = scalar_lea.vmem [#allocation4], %s1608
          %1610 = dma.done %s1606, 512
        $region60: #{tpu_custom_call.1} parent=55 // pred_fallthru
          _
      $region56: #{tpu_custom_call.1} parent=5 // pred_fallthru
        _
    $region6: #{tpu_custom_call.1} parent=1 // loop_footer
      %s20 = sadd.s32 1, %s16
    $region7: #{tpu_custom_call.1} parent=1 // loop_footer_branch
      %15 = sbr.rel target = $region3
    $region8: #{tpu_custom_call.1} parent=1 // loop_exit
      _
    %1611 = vsyncpa [#allocation5], 1
    %s1612 = scalar_lea.sflag [#allocation5], 1
    %1613 = vsyncpa %s1612, 1

</llo_original>
